<compile_context>
chip_gen: v6e
topology: v6e:2x2x1
jax: 0.10.0
libtpu: 0.0.40
codegen_flags: <defaults>
</compile_context>

<pallas_src>
import jax
import jax.numpy as jnp
from jax.experimental import pallas as pl
from jax.experimental.pallas import tpu as pltpu

LAYER_SIZES = [784, 512, 256, 128, 64, 32, 10]
LANE = 128


def _cdiv(a, b):
    return (a + b - 1) // b


def _round_up(x, m):
    return _cdiv(x, m) * m


def _choose_batch_tile(B):
    """Batch tile TB (multiple of 16 for bf16 sublane packing).

    - tiny batch: one 16-row tile (latency regime)
    - moderate batch (<= 1024): exactly two tiles -> even split across v7x's
      two TensorCores via dimension_semantics=("parallel",)
    - large batch: ~512-row tiles with an even tile count; 512 cap keeps the
      double-buffered f32 input tile (~1.6 MiB each) far under v5e's 16 MiB
      default scoped VMEM.
    """
    if B <= 16:
        return 16
    if B <= 1024:
        return _round_up(_cdiv(B, 2), 16)
    n_tiles = _round_up(_cdiv(B, 512), 2)          # even number of tiles
    return min(512, _round_up(_cdiv(B, n_tiles), 16))


def mlp_kernel(x_ref,
               w1_ref, b1_ref,
               w2_ref, b2_ref,
               w3_ref, b3_ref,
               w4_ref, b4_ref,
               w5_ref, b5_ref,
               w6_ref, b6_ref,
               o_ref):
    """Fused forward pass over one (TB, 784) batch tile, fully in VMEM."""
    # Input arrives f32 from HBM; cast to bf16 on the VPU (kernel is
    # HBM/overhead-bound, the cast is free).
    h = x_ref[...].astype(jnp.bfloat16)            # (TB, 784) bf16

    def dense(h, w_ref, b_ref, relu):
        # bf16 x bf16 on the MXU, accumulate in f32.
        y = jnp.dot(h, w_ref[...], preferred_element_type=jnp.float32)
        y = y + b_ref[...]                         # (1, out) f32 bias broadcast
        if relu:
            y = jnp.maximum(y, 0.0)
            return y.astype(jnp.bfloat16)          # back to bf16 for next matmul
        return y                                   # final layer stays f32

    h = dense(h, w1_ref, b1_ref, relu=True)
    h = dense(h, w2_ref, b2_ref, relu=True)
    h = dense(h, w3_ref, b3_ref, relu=True)
    h = dense(h, w4_ref, b4_ref, relu=True)
    h = dense(h, w5_ref, b5_ref, relu=True)
    h = dense(h, w6_ref, b6_ref, relu=False)

    o_ref[...] = h.astype(o_ref.dtype)


@jax.jit
def dense_model_forward(x_nchw, params):
    """x_nchw: (B, 1, 28, 28) f32. params: list of (W:(in,out) f32, b:(1,out) f32)."""
    B = x_nchw.shape[0]
    x2d = x_nchw.reshape(B, -1)                    # nn.Flatten; stays f32, no HBM copy
    in_features = x2d.shape[1]
    classes = params[-1][0].shape[1]
    classes_pad = _round_up(classes, LANE)         # lane-dense output (10 -> 128)

    TB = _choose_batch_tile(B)
    n_tiles = _cdiv(B, TB)                         # last tile may be partial

    # Weights -> bf16 (halves HBM traffic, MXU-native); biases stay f32.
    flat_params = []
    last = len(params) - 1
    for li, (w, b) in enumerate(params):
        w = w.astype(jnp.bfloat16)
        b = b.astype(jnp.float32)
        if li == last and classes_pad != classes:
            w = jnp.pad(w, ((0, 0), (0, classes_pad - classes)))
            b = jnp.pad(b, ((0, 0), (0, classes_pad - classes)))
        flat_params.append(w)
        flat_params.append(b)

    x_spec = pl.BlockSpec((TB, in_features), lambda i: (i, 0))
    out_spec = pl.BlockSpec((TB, classes_pad), lambda i: (i, 0))
    # Constant block index -> fetched once, resident across grid steps;
    # single-buffered since the block never changes.
    param_specs = [
        pl.BlockSpec(p.shape, lambda i: (0, 0), pipeline_mode=pl.Buffered(1))
        for p in flat_params
    ]

    out = pl.pallas_call(
        mlp_kernel,
        out_shape=jax.ShapeDtypeStruct((B, classes_pad), jnp.float32),
        grid=(n_tiles,),
        in_specs=[x_spec] + param_specs,
        out_specs=out_spec,
        compiler_params=pltpu.CompilerParams(
            dimension_semantics=("parallel",)),    # v7x: batch tiles over 2 TCs
    )(x2d, *flat_params)

    return out[:, :classes]


def init_params(key):
    """Deterministic synthetic parameter init (shapes match DenseModel)."""
    params = []
    for i in range(len(LAYER_SIZES) - 1):
        fan_in, fan_out = LAYER_SIZES[i], LAYER_SIZES[i + 1]
        key, kw, kb = jax.random.split(key, 3)
        bound = 1.0 / jnp.sqrt(fan_in)
        w = jax.random.uniform(kw, (fan_in, fan_out), jnp.float32,
                               minval=-bound, maxval=bound)
        b = jax.random.uniform(kb, (1, fan_out), jnp.float32,
                               minval=-bound, maxval=bound)
        params.append((w, b))
    return params


def reference_forward(x_nchw, params):
    """Pure-JAX f32 reference for sanity checking."""
    h = x_nchw.reshape(x_nchw.shape[0], -1)
    for i, (w, b) in enumerate(params):
        h = h @ w + b
        if i < len(params) - 1:
            h = jnp.maximum(h, 0.0)
    return h


if __name__ == "__main__":
    key = jax.random.PRNGKey(0)
    key, kx1, kx2 = jax.random.split(key, 3)
    params = init_params(key)

    # Small, MNIST-like input: (B, C=1, 28, 28) -> 784 features.
    B = 4
    x = jax.random.normal(kx1, (B, 1, 28, 28), jnp.float32)
    out = jax.block_until_ready(dense_model_forward(x, params))
    ref = reference_forward(x, params)
    assert out.shape == (B, 10), out.shape
    err = jnp.max(jnp.abs(out - ref))
    assert err < 3e-2, f"max abs err {err}"   # bf16 matmul path -> loosened tol

    # Second check: multi-tile grid with a partial last block (TB=304, grid=(2,)).
    B2 = 600
    x2 = jax.random.normal(kx2, (B2, 1, 28, 28), jnp.float32)
    out2 = jax.block_until_ready(dense_model_forward(x2, params))
    ref2 = reference_forward(x2, params)
    assert out2.shape == (B2, 10), out2.shape
    err2 = jnp.max(jnp.abs(out2 - ref2))
    assert err2 < 3e-2, f"max abs err {err2}"

    print("KERNEL_OK")
</pallas_src>

<mosaic_0001>
module attributes {stable_mosaic.version = 11 : i64} {
  func.func @mlp_kernel(%arg0: i32, %arg1: memref<16x784xf32, #tpu.memory_space<vmem>>, %arg2: memref<784x512xbf16, #tpu.memory_space<vmem>>, %arg3: memref<1x512xf32, #tpu.memory_space<vmem>>, %arg4: memref<512x256xbf16, #tpu.memory_space<vmem>>, %arg5: memref<1x256xf32, #tpu.memory_space<vmem>>, %arg6: memref<256x128xbf16, #tpu.memory_space<vmem>>, %arg7: memref<1x128xf32, #tpu.memory_space<vmem>>, %arg8: memref<128x64xbf16, #tpu.memory_space<vmem>>, %arg9: memref<1x64xf32, #tpu.memory_space<vmem>>, %arg10: memref<64x32xbf16, #tpu.memory_space<vmem>>, %arg11: memref<1x32xf32, #tpu.memory_space<vmem>>, %arg12: memref<32x128xbf16, #tpu.memory_space<vmem>>, %arg13: memref<1x128xf32, #tpu.memory_space<vmem>>, %arg14: memref<16x128xf32, #tpu.memory_space<vmem>>) attributes {dimension_semantics = [#tpu.dimension_semantics<parallel>], iteration_bounds = array<i64: 1>, scalar_prefetch = 0 : i64, scratch_operands = 0 : i64, tpu.core_type = #tpu.core_type<tc>, window_params = [{transform_indices = @transform_0, window_bounds = array<i64: 16, 784>}, {pipeline_mode = #tpu.pipeline_mode<synchronous>, transform_indices = @transform_1, window_bounds = array<i64: 784, 512>}, {pipeline_mode = #tpu.pipeline_mode<synchronous>, transform_indices = @transform_2, window_bounds = array<i64: 1, 512>}, {pipeline_mode = #tpu.pipeline_mode<synchronous>, transform_indices = @transform_3, window_bounds = array<i64: 512, 256>}, {pipeline_mode = #tpu.pipeline_mode<synchronous>, transform_indices = @transform_4, window_bounds = array<i64: 1, 256>}, {pipeline_mode = #tpu.pipeline_mode<synchronous>, transform_indices = @transform_5, window_bounds = array<i64: 256, 128>}, {pipeline_mode = #tpu.pipeline_mode<synchronous>, transform_indices = @transform_6, window_bounds = array<i64: 1, 128>}, {pipeline_mode = #tpu.pipeline_mode<synchronous>, transform_indices = @transform_7, window_bounds = array<i64: 128, 64>}, {pipeline_mode = #tpu.pipeline_mode<synchronous>, transform_indices = @transform_8, window_bounds = array<i64: 1, 64>}, {pipeline_mode = #tpu.pipeline_mode<synchronous>, transform_indices = @transform_9, window_bounds = array<i64: 64, 32>}, {pipeline_mode = #tpu.pipeline_mode<synchronous>, transform_indices = @transform_10, window_bounds = array<i64: 1, 32>}, {pipeline_mode = #tpu.pipeline_mode<synchronous>, transform_indices = @transform_11, window_bounds = array<i64: 32, 128>}, {pipeline_mode = #tpu.pipeline_mode<synchronous>, transform_indices = @transform_12, window_bounds = array<i64: 1, 128>}, {transform_indices = @transform_13, window_bounds = array<i64: 16, 128>}]} {
    %c0 = arith.constant 0 : index
    %c0_0 = arith.constant 0 : index
    %0 = vector.load %arg1[%c0, %c0_0] : memref<16x784xf32, #tpu.memory_space<vmem>>, vector<16x784xf32>
    %1 = arith.truncf %0 : vector<16x784xf32> to vector<16x784xbf16>
    %c0_1 = arith.constant 0 : index
    %c0_2 = arith.constant 0 : index
    %2 = vector.load %arg2[%c0_1, %c0_2] : memref<784x512xbf16, #tpu.memory_space<vmem>>, vector<784x512xbf16>
    %cst = arith.constant dense<0.000000e+00> : vector<16x512xf32>
    %3 = tpu.matmul %1, %2, %cst {dimension_numbers = #tpu.dot_dimension_numbers<[1], [0], [0], [1], [0, 0, 1, 1], [], []>} : vector<16x784xbf16>, vector<784x512xbf16>, vector<16x512xf32> -> vector<16x512xf32>
    %c0_3 = arith.constant 0 : index
    %c0_4 = arith.constant 0 : index
    %4 = vector.load %arg3[%c0_3, %c0_4] : memref<1x512xf32, #tpu.memory_space<vmem>>, vector<1x512xf32>
    %5 = vector.broadcast %4 : vector<1x512xf32> to vector<16x512xf32>
    %6 = arith.addf %3, %5 : vector<16x512xf32>
    %cst_5 = arith.constant 0.000000e+00 : f32
    %7 = vector.broadcast %cst_5 : f32 to vector<16x512xf32>
    %8 = arith.maximumf %6, %7 : vector<16x512xf32>
    %9 = arith.truncf %8 : vector<16x512xf32> to vector<16x512xbf16>
    %c0_6 = arith.constant 0 : index
    %c0_7 = arith.constant 0 : index
    %10 = vector.load %arg4[%c0_6, %c0_7] : memref<512x256xbf16, #tpu.memory_space<vmem>>, vector<512x256xbf16>
    %cst_8 = arith.constant dense<0.000000e+00> : vector<16x256xf32>
    %11 = tpu.matmul %9, %10, %cst_8 {dimension_numbers = #tpu.dot_dimension_numbers<[1], [0], [0], [1], [0, 0, 1, 1], [], []>} : vector<16x512xbf16>, vector<512x256xbf16>, vector<16x256xf32> -> vector<16x256xf32>
    %c0_9 = arith.constant 0 : index
    %c0_10 = arith.constant 0 : index
    %12 = vector.load %arg5[%c0_9, %c0_10] : memref<1x256xf32, #tpu.memory_space<vmem>>, vector<1x256xf32>
    %13 = vector.broadcast %12 : vector<1x256xf32> to vector<16x256xf32>
    %14 = arith.addf %11, %13 : vector<16x256xf32>
    %cst_11 = arith.constant 0.000000e+00 : f32
    %15 = vector.broadcast %cst_11 : f32 to vector<16x256xf32>
    %16 = arith.maximumf %14, %15 : vector<16x256xf32>
    %17 = arith.truncf %16 : vector<16x256xf32> to vector<16x256xbf16>
    %c0_12 = arith.constant 0 : index
    %c0_13 = arith.constant 0 : index
    %18 = vector.load %arg6[%c0_12, %c0_13] : memref<256x128xbf16, #tpu.memory_space<vmem>>, vector<256x128xbf16>
    %cst_14 = arith.constant dense<0.000000e+00> : vector<16x128xf32>
    %19 = tpu.matmul %17, %18, %cst_14 {dimension_numbers = #tpu.dot_dimension_numbers<[1], [0], [0], [1], [0, 0, 1, 1], [], []>} : vector<16x256xbf16>, vector<256x128xbf16>, vector<16x128xf32> -> vector<16x128xf32>
    %c0_15 = arith.constant 0 : index
    %c0_16 = arith.constant 0 : index
    %20 = vector.load %arg7[%c0_15, %c0_16] : memref<1x128xf32, #tpu.memory_space<vmem>>, vector<1x128xf32>
    %21 = vector.broadcast %20 : vector<1x128xf32> to vector<16x128xf32>
    %22 = arith.addf %19, %21 : vector<16x128xf32>
    %cst_17 = arith.constant 0.000000e+00 : f32
    %23 = vector.broadcast %cst_17 : f32 to vector<16x128xf32>
    %24 = arith.maximumf %22, %23 : vector<16x128xf32>
    %25 = arith.truncf %24 : vector<16x128xf32> to vector<16x128xbf16>
    %c0_18 = arith.constant 0 : index
    %c0_19 = arith.constant 0 : index
    %26 = vector.load %arg8[%c0_18, %c0_19] : memref<128x64xbf16, #tpu.memory_space<vmem>>, vector<128x64xbf16>
    %cst_20 = arith.constant dense<0.000000e+00> : vector<16x64xf32>
    %27 = tpu.matmul %25, %26, %cst_20 {dimension_numbers = #tpu.dot_dimension_numbers<[1], [0], [0], [1], [0, 0, 1, 1], [], []>} : vector<16x128xbf16>, vector<128x64xbf16>, vector<16x64xf32> -> vector<16x64xf32>
    %c0_21 = arith.constant 0 : index
    %c0_22 = arith.constant 0 : index
    %28 = vector.load %arg9[%c0_21, %c0_22] : memref<1x64xf32, #tpu.memory_space<vmem>>, vector<1x64xf32>
    %29 = vector.broadcast %28 : vector<1x64xf32> to vector<16x64xf32>
    %30 = arith.addf %27, %29 : vector<16x64xf32>
    %cst_23 = arith.constant 0.000000e+00 : f32
    %31 = vector.broadcast %cst_23 : f32 to vector<16x64xf32>
    %32 = arith.maximumf %30, %31 : vector<16x64xf32>
    %33 = arith.truncf %32 : vector<16x64xf32> to vector<16x64xbf16>
    %c0_24 = arith.constant 0 : index
    %c0_25 = arith.constant 0 : index
    %34 = vector.load %arg10[%c0_24, %c0_25] : memref<64x32xbf16, #tpu.memory_space<vmem>>, vector<64x32xbf16>
    %cst_26 = arith.constant dense<0.000000e+00> : vector<16x32xf32>
    %35 = tpu.matmul %33, %34, %cst_26 {dimension_numbers = #tpu.dot_dimension_numbers<[1], [0], [0], [1], [0, 0, 1, 1], [], []>} : vector<16x64xbf16>, vector<64x32xbf16>, vector<16x32xf32> -> vector<16x32xf32>
    %c0_27 = arith.constant 0 : index
    %c0_28 = arith.constant 0 : index
    %36 = vector.load %arg11[%c0_27, %c0_28] : memref<1x32xf32, #tpu.memory_space<vmem>>, vector<1x32xf32>
    %37 = vector.broadcast %36 : vector<1x32xf32> to vector<16x32xf32>
    %38 = arith.addf %35, %37 : vector<16x32xf32>
    %cst_29 = arith.constant 0.000000e+00 : f32
    %39 = vector.broadcast %cst_29 : f32 to vector<16x32xf32>
    %40 = arith.maximumf %38, %39 : vector<16x32xf32>
    %41 = arith.truncf %40 : vector<16x32xf32> to vector<16x32xbf16>
    %c0_30 = arith.constant 0 : index
    %c0_31 = arith.constant 0 : index
    %42 = vector.load %arg12[%c0_30, %c0_31] : memref<32x128xbf16, #tpu.memory_space<vmem>>, vector<32x128xbf16>
    %cst_32 = arith.constant dense<0.000000e+00> : vector<16x128xf32>
    %43 = tpu.matmul %41, %42, %cst_32 {dimension_numbers = #tpu.dot_dimension_numbers<[1], [0], [0], [1], [0, 0, 1, 1], [], []>} : vector<16x32xbf16>, vector<32x128xbf16>, vector<16x128xf32> -> vector<16x128xf32>
    %c0_33 = arith.constant 0 : index
    %c0_34 = arith.constant 0 : index
    %44 = vector.load %arg13[%c0_33, %c0_34] : memref<1x128xf32, #tpu.memory_space<vmem>>, vector<1x128xf32>
    %45 = vector.broadcast %44 : vector<1x128xf32> to vector<16x128xf32>
    %46 = arith.addf %43, %45 : vector<16x128xf32>
    %c0_35 = arith.constant 0 : index
    %c0_36 = arith.constant 0 : index
    %47 = vector.load %arg14[%c0_35, %c0_36] : memref<16x128xf32, #tpu.memory_space<vmem>>, vector<16x128xf32>
    tpu.vector_store %arg14[%c0_35, %c0_36], %46 {strides = array<i32>} : memref<16x128xf32, #tpu.memory_space<vmem>>, vector<16x128xf32>,
    return
  }
  func.func @transform_0(%arg0: i32) -> (i32, i32) {
    %c0_i32 = arith.constant 0 : i32
    %c0_i32_0 = arith.constant 0 : i32
    return %arg0, %c0_i32 : i32, i32
  }
  func.func @transform_1(%arg0: i32) -> (i32, i32) {
    %c0_i32 = arith.constant 0 : i32
    %c0_i32_0 = arith.constant 0 : i32
    %c0_i32_1 = arith.constant 0 : i32
    return %c0_i32, %c0_i32_0 : i32, i32
  }
  func.func @transform_2(%arg0: i32) -> (i32, i32) {
    %c0_i32 = arith.constant 0 : i32
    %c0_i32_0 = arith.constant 0 : i32
    %c0_i32_1 = arith.constant 0 : i32
    return %c0_i32, %c0_i32_0 : i32, i32
  }
  func.func @transform_3(%arg0: i32) -> (i32, i32) {
    %c0_i32 = arith.constant 0 : i32
    %c0_i32_0 = arith.constant 0 : i32
    %c0_i32_1 = arith.constant 0 : i32
    return %c0_i32, %c0_i32_0 : i32, i32
  }
  func.func @transform_4(%arg0: i32) -> (i32, i32) {
    %c0_i32 = arith.constant 0 : i32
    %c0_i32_0 = arith.constant 0 : i32
    %c0_i32_1 = arith.constant 0 : i32
    return %c0_i32, %c0_i32_0 : i32, i32
  }
  func.func @transform_5(%arg0: i32) -> (i32, i32) {
    %c0_i32 = arith.constant 0 : i32
    %c0_i32_0 = arith.constant 0 : i32
    %c0_i32_1 = arith.constant 0 : i32
    return %c0_i32, %c0_i32_0 : i32, i32
  }
  func.func @transform_6(%arg0: i32) -> (i32, i32) {
    %c0_i32 = arith.constant 0 : i32
    %c0_i32_0 = arith.constant 0 : i32
    %c0_i32_1 = arith.constant 0 : i32
    return %c0_i32, %c0_i32_0 : i32, i32
  }
  func.func @transform_7(%arg0: i32) -> (i32, i32) {
    %c0_i32 = arith.constant 0 : i32
    %c0_i32_0 = arith.constant 0 : i32
    %c0_i32_1 = arith.constant 0 : i32
    return %c0_i32, %c0_i32_0 : i32, i32
  }
  func.func @transform_8(%arg0: i32) -> (i32, i32) {
    %c0_i32 = arith.constant 0 : i32
    %c0_i32_0 = arith.constant 0 : i32
    %c0_i32_1 = arith.constant 0 : i32
    return %c0_i32, %c0_i32_0 : i32, i32
  }
  func.func @transform_9(%arg0: i32) -> (i32, i32) {
    %c0_i32 = arith.constant 0 : i32
    %c0_i32_0 = arith.constant 0 : i32
    %c0_i32_1 = arith.constant 0 : i32
    return %c0_i32, %c0_i32_0 : i32, i32
  }
  func.func @transform_10(%arg0: i32) -> (i32, i32) {
    %c0_i32 = arith.constant 0 : i32
    %c0_i32_0 = arith.constant 0 : i32
    %c0_i32_1 = arith.constant 0 : i32
    return %c0_i32, %c0_i32_0 : i32, i32
  }
  func.func @transform_11(%arg0: i32) -> (i32, i32) {
    %c0_i32 = arith.constant 0 : i32
    %c0_i32_0 = arith.constant 0 : i32
    %c0_i32_1 = arith.constant 0 : i32
    return %c0_i32, %c0_i32_0 : i32, i32
  }
  func.func @transform_12(%arg0: i32) -> (i32, i32) {
    %c0_i32 = arith.constant 0 : i32
    %c0_i32_0 = arith.constant 0 : i32
    %c0_i32_1 = arith.constant 0 : i32
    return %c0_i32, %c0_i32_0 : i32, i32
  }
  func.func @transform_13(%arg0: i32) -> (i32, i32) {
    %c0_i32 = arith.constant 0 : i32
    %c0_i32_0 = arith.constant 0 : i32
    return %arg0, %c0_i32 : i32, i32
  }
}

</mosaic_0001>

<llo_original>
// kernel: dense_model_forward.1
$region0: #{dense_model_forward.1}
  #allocation0 [shape = 'u32[]', space=smem, size = 0x4, offset = 0x4, fixed_abs, tag = 'smem constant byte address 0x4 - core index']
  #allocation1 [shape = 'u32[144,128]{1,0:T(1,128)}', space=vmem, size = 0x12000, scoped, tag = 'internal scratch']
  %s0 = inlined_call_operand.vmem [shape: f32[4,784], index: 0, kind: input, shape index: {}]
  %s1 = inlined_call_operand.vmem [shape: bf16[784,512], index: 1, kind: input, shape index: {}]
  %s2 = inlined_call_operand.vmem [shape: f32[1,512], index: 2, kind: input, shape index: {}]
  %s3 = inlined_call_operand.vmem [shape: bf16[512,256], index: 3, kind: input, shape index: {}]
  %s4 = inlined_call_operand.vmem [shape: f32[1,256], index: 4, kind: input, shape index: {}]
  %s5 = inlined_call_operand.vmem [shape: bf16[256,128], index: 5, kind: input, shape index: {}]
  %s6 = inlined_call_operand.vmem [shape: f32[1,128], index: 6, kind: input, shape index: {}]
  %s7 = inlined_call_operand.vmem [shape: bf16[128,64], index: 7, kind: input, shape index: {}]
  %s8 = inlined_call_operand.vmem [shape: f32[1,64], index: 8, kind: input, shape index: {}]
  %s9 = inlined_call_operand.vmem [shape: bf16[64,32], index: 9, kind: input, shape index: {}]
  %s10 = inlined_call_operand.vmem [shape: f32[1,32], index: 10, kind: input, shape index: {}]
  %s11 = inlined_call_operand.vmem [shape: bf16[32,128], index: 11, kind: input, shape index: {}]
  %s12 = inlined_call_operand.vmem [shape: f32[1,128], index: 12, kind: input, shape index: {}]
  %s13 = inlined_call_operand.hbm [shape: f32[4,128], index: 13, kind: output, shape index: {}]
  %s14 = sld [smem:[#allocation0]]
  $region62: #{dense_model_forward.1} parent=0
    _
  %s16 = ssub.s32 1, %s14
  %s17 = scalar_select 0, %s16, %s14
  $region1: #{dense_model_forward.1} parent=0
    #allocation2 [shape = 'u8[8192]{0}', space=vmem, size = 0x2000, scoped, tag = 'output window, operand 0, single buffered']
    #allocation3 [shape = 's32[1]{0}', space=sflag, size = 0x4, scoped, tag = 'scoped memory for dense_model_forward.1']
    %18 = vsyncpa [#allocation3], 0
    // Predicated region
    $region2: #{dense_model_forward.1} parent=1 // pred_check
      _
    $region3: #{dense_model_forward.1} parent=1 // pred_check_branch
      %20 = sbr.rel (0) target = $region5
    $region4: #{dense_model_forward.1} parent=1 // pred_region
      _
    $region5: #{dense_model_forward.1} parent=1 // pred_fallthru
      _
    // Predicated region
    $region6: #{dense_model_forward.1} parent=1 // pred_check
      _
    $region7: #{dense_model_forward.1} parent=1 // pred_check_branch
      %22 = sbr.rel (0) target = $region9
    $region8: #{dense_model_forward.1} parent=1 // pred_region
      _
    $region9: #{dense_model_forward.1} parent=1 // pred_fallthru
      _
    // Predicated region
    $region10: #{dense_model_forward.1} parent=1 // pred_check
      _
    $region11: #{dense_model_forward.1} parent=1 // pred_check_branch
      %24 = sbr.rel (0) target = $region13
    $region12: #{dense_model_forward.1} parent=1 // pred_region
      _
    $region13: #{dense_model_forward.1} parent=1 // pred_fallthru
      _
    // Predicated region
    $region14: #{dense_model_forward.1} parent=1 // pred_check
      _
    $region15: #{dense_model_forward.1} parent=1 // pred_check_branch
      %26 = sbr.rel (0) target = $region17
    $region16: #{dense_model_forward.1} parent=1 // pred_region
      _
    $region17: #{dense_model_forward.1} parent=1 // pred_fallthru
      _
    // Predicated region
    $region18: #{dense_model_forward.1} parent=1 // pred_check
      _
    $region19: #{dense_model_forward.1} parent=1 // pred_check_branch
      %28 = sbr.rel (0) target = $region21
    $region20: #{dense_model_forward.1} parent=1 // pred_region
      _
    $region21: #{dense_model_forward.1} parent=1 // pred_fallthru
      _
    // Predicated region
    $region22: #{dense_model_forward.1} parent=1 // pred_check
      _
    $region23: #{dense_model_forward.1} parent=1 // pred_check_branch
      %30 = sbr.rel (0) target = $region25
    $region24: #{dense_model_forward.1} parent=1 // pred_region
      _
    $region25: #{dense_model_forward.1} parent=1 // pred_fallthru
      _
    // Predicated region
    $region26: #{dense_model_forward.1} parent=1 // pred_check
      _
    $region27: #{dense_model_forward.1} parent=1 // pred_check_branch
      %32 = sbr.rel (0) target = $region29
    $region28: #{dense_model_forward.1} parent=1 // pred_region
      _
    $region29: #{dense_model_forward.1} parent=1 // pred_fallthru
      _
    // Predicated region
    $region30: #{dense_model_forward.1} parent=1 // pred_check
      _
    $region31: #{dense_model_forward.1} parent=1 // pred_check_branch
      %34 = sbr.rel (0) target = $region33
    $region32: #{dense_model_forward.1} parent=1 // pred_region
      _
    $region33: #{dense_model_forward.1} parent=1 // pred_fallthru
      _
    // Predicated region
    $region34: #{dense_model_forward.1} parent=1 // pred_check
      _
    $region35: #{dense_model_forward.1} parent=1 // pred_check_branch
      %36 = sbr.rel (0) target = $region37
    $region36: #{dense_model_forward.1} parent=1 // pred_region
      _
    $region37: #{dense_model_forward.1} parent=1 // pred_fallthru
      _
    // Predicated region
    $region38: #{dense_model_forward.1} parent=1 // pred_check
      _
    $region39: #{dense_model_forward.1} parent=1 // pred_check_branch
      %38 = sbr.rel (0) target = $region41
    $region40: #{dense_model_forward.1} parent=1 // pred_region
      _
    $region41: #{dense_model_forward.1} parent=1 // pred_fallthru
      _
    // Predicated region
    $region42: #{dense_model_forward.1} parent=1 // pred_check
      _
    $region43: #{dense_model_forward.1} parent=1 // pred_check_branch
      %40 = sbr.rel (0) target = $region45
    $region44: #{dense_model_forward.1} parent=1 // pred_region
      _
    $region45: #{dense_model_forward.1} parent=1 // pred_fallthru
      _
    // Predicated region
    $region46: #{dense_model_forward.1} parent=1 // pred_check
      _
    $region47: #{dense_model_forward.1} parent=1 // pred_check_branch
      %42 = sbr.rel (0) target = $region49
    $region48: #{dense_model_forward.1} parent=1 // pred_region
      _
    $region49: #{dense_model_forward.1} parent=1 // pred_fallthru
      _
    // Predicated region
    $region50: #{dense_model_forward.1} parent=1 // pred_check
      _
    $region51: #{dense_model_forward.1} parent=1 // pred_check_branch
      %44 = sbr.rel (0) target = $region53
    $region52: #{dense_model_forward.1} parent=1 // pred_region
      _
    $region53: #{dense_model_forward.1} parent=1 // pred_fallthru
      _
    %v46 = vld [vmem:[%s0] sm:$0xff]
    %v47 = vld [vmem:[%s0 + $0x8] sm:$0xff]
    %v48 = vld [vmem:[%s0 + $0x10] sm:$0xff]
    %v49 = vld [vmem:[%s0 + $0x18] sm:$0xf]
    %v50 = vld [vmem:[%s0 + $0x1c] sm:$0xff]
    %v51 = vld [vmem:[%s0 + $0x24] sm:$0xff]
    %v52 = vld [vmem:[%s0 + $0x2c] sm:$0xff]
    %v53 = vld [vmem:[%s0 + $0x34] sm:$0xf]
    %v54 = vld [vmem:[%s0 + $0x38] sm:$0xff]
    %v55 = vld [vmem:[%s0 + $0x40] sm:$0xff]
    %v56 = vld [vmem:[%s0 + $0x48] sm:$0xff]
    %v57 = vld [vmem:[%s0 + $0x50] sm:$0xf]
    %v58 = vld [vmem:[%s0 + $0x54] sm:$0xff]
    %v59 = vld [vmem:[%s0 + $0x5c] sm:$0xff]
    %v60 = vld [vmem:[%s0 + $0x64] sm:$0xff]
    %v61 = vld [vmem:[%s0 + $0x6c] sm:$0xf]
    %v78 = vcombine.low %v46, %v50
    %v79 = vcombine.high %v46, %v50
    %v80 = vcombine.low %v47, %v51
    %v81 = vcombine.high %v47, %v51
    %v82 = vcombine.low %v48, %v52
    %v83 = vcombine.high %v48, %v52
    %v84 = vcombine.low %v49, %v53
    %v85 = vcombine.low %v54, %v58
    %v86 = vcombine.high %v54, %v58
    %v87 = vcombine.low %v55, %v59
    %v88 = vcombine.high %v55, %v59
    %v89 = vcombine.low %v56, %v60
    %v90 = vcombine.high %v56, %v60
    %v91 = vcombine.low %v57, %v61
    %v106 = vpack.c.bf16 %v85, %v78
    %v107 = vpack.c.bf16 %v86, %v79
    %v108 = vpack.c.bf16 %v87, %v80
    %v109 = vpack.c.bf16 %v88, %v81
    %v110 = vpack.c.bf16 %v89, %v82
    %v111 = vpack.c.bf16 %v90, %v83
    %v112 = vpack.c.bf16 %v91, %v84
    %v113 = vld [vmem:[%s1] sm:$0xff]
    %v114 = vld [vmem:[%s1 + $0x8] sm:$0xff]
    %v115 = vld [vmem:[%s1 + $0x10] sm:$0xff]
    %v116 = vld [vmem:[%s1 + $0x18] sm:$0xff]
    %v117 = vld [vmem:[%s1 + $0x20] sm:$0xff]
    %v118 = vld [vmem:[%s1 + $0x28] sm:$0xff]
    %v119 = vld [vmem:[%s1 + $0x30] sm:$0xff]
    %v120 = vld [vmem:[%s1 + $0x38] sm:$0xff]
    %v121 = vld [vmem:[%s1 + $0x40] sm:$0xff]
    %v122 = vld [vmem:[%s1 + $0x48] sm:$0xff]
    %v123 = vld [vmem:[%s1 + $0x50] sm:$0xff]
    %v124 = vld [vmem:[%s1 + $0x58] sm:$0xff]
    %v125 = vld [vmem:[%s1 + $0x60] sm:$0xff]
    %v126 = vld [vmem:[%s1 + $0x68] sm:$0xff]
    %v127 = vld [vmem:[%s1 + $0x70] sm:$0xff]
    %v128 = vld [vmem:[%s1 + $0x78] sm:$0xff]
    %v129 = vld [vmem:[%s1 + $0x80] sm:$0xff]
    %v130 = vld [vmem:[%s1 + $0x88] sm:$0xff]
    %v131 = vld [vmem:[%s1 + $0x90] sm:$0xff]
    %v132 = vld [vmem:[%s1 + $0x98] sm:$0xff]
    %v133 = vld [vmem:[%s1 + $0xa0] sm:$0xff]
    %v134 = vld [vmem:[%s1 + $0xa8] sm:$0xff]
    %v135 = vld [vmem:[%s1 + $0xb0] sm:$0xff]
    %v136 = vld [vmem:[%s1 + $0xb8] sm:$0xff]
    %v137 = vld [vmem:[%s1 + $0xc0] sm:$0xff]
    %v138 = vld [vmem:[%s1 + $0xc8] sm:$0xff]
    %v139 = vld [vmem:[%s1 + $0xd0] sm:$0xff]
    %v140 = vld [vmem:[%s1 + $0xd8] sm:$0xff]
    %v141 = vld [vmem:[%s1 + $0xe0] sm:$0xff]
    %v142 = vld [vmem:[%s1 + $0xe8] sm:$0xff]
    %v143 = vld [vmem:[%s1 + $0xf0] sm:$0xff]
    %v144 = vld [vmem:[%s1 + $0xf8] sm:$0xff]
    %v145 = vld [vmem:[%s1 + $0x100] sm:$0xff]
    %v146 = vld [vmem:[%s1 + $0x108] sm:$0xff]
    %v147 = vld [vmem:[%s1 + $0x110] sm:$0xff]
    %v148 = vld [vmem:[%s1 + $0x118] sm:$0xff]
    %v149 = vld [vmem:[%s1 + $0x120] sm:$0xff]
    %v150 = vld [vmem:[%s1 + $0x128] sm:$0xff]
    %v151 = vld [vmem:[%s1 + $0x130] sm:$0xff]
    %v152 = vld [vmem:[%s1 + $0x138] sm:$0xff]
    %v153 = vld [vmem:[%s1 + $0x140] sm:$0xff]
    %v154 = vld [vmem:[%s1 + $0x148] sm:$0xff]
    %v155 = vld [vmem:[%s1 + $0x150] sm:$0xff]
    %v156 = vld [vmem:[%s1 + $0x158] sm:$0xff]
    %v157 = vld [vmem:[%s1 + $0x160] sm:$0xff]
    %v158 = vld [vmem:[%s1 + $0x168] sm:$0xff]
    %v159 = vld [vmem:[%s1 + $0x170] sm:$0xff]
    %v160 = vld [vmem:[%s1 + $0x178] sm:$0xff]
    %v161 = vld [vmem:[%s1 + $0x180] sm:$0xff]
    %v162 = vld [vmem:[%s1 + $0x188] sm:$0xff]
    %v163 = vld [vmem:[%s1 + $0x190] sm:$0xff]
    %v164 = vld [vmem:[%s1 + $0x198] sm:$0xff]
    %v165 = vld [vmem:[%s1 + $0x1a0] sm:$0xff]
    %v166 = vld [vmem:[%s1 + $0x1a8] sm:$0xff]
    %v167 = vld [vmem:[%s1 + $0x1b0] sm:$0xff]
    %v168 = vld [vmem:[%s1 + $0x1b8] sm:$0xff]
    %v169 = vld [vmem:[%s1 + $0x1c0] sm:$0xff]
    %v170 = vld [vmem:[%s1 + $0x1c8] sm:$0xff]
    %v171 = vld [vmem:[%s1 + $0x1d0] sm:$0xff]
    %v172 = vld [vmem:[%s1 + $0x1d8] sm:$0xff]
    %v173 = vld [vmem:[%s1 + $0x1e0] sm:$0xff]
    %v174 = vld [vmem:[%s1 + $0x1e8] sm:$0xff]
    %v175 = vld [vmem:[%s1 + $0x1f0] sm:$0xff]
    %v176 = vld [vmem:[%s1 + $0x1f8] sm:$0xff]
    %v177 = vld [vmem:[%s1 + $0x200] sm:$0xff]
    %v178 = vld [vmem:[%s1 + $0x208] sm:$0xff]
    %v179 = vld [vmem:[%s1 + $0x210] sm:$0xff]
    %v180 = vld [vmem:[%s1 + $0x218] sm:$0xff]
    %v181 = vld [vmem:[%s1 + $0x220] sm:$0xff]
    %v182 = vld [vmem:[%s1 + $0x228] sm:$0xff]
    %v183 = vld [vmem:[%s1 + $0x230] sm:$0xff]
    %v184 = vld [vmem:[%s1 + $0x238] sm:$0xff]
    %v185 = vld [vmem:[%s1 + $0x240] sm:$0xff]
    %v186 = vld [vmem:[%s1 + $0x248] sm:$0xff]
    %v187 = vld [vmem:[%s1 + $0x250] sm:$0xff]
    %v188 = vld [vmem:[%s1 + $0x258] sm:$0xff]
    %v189 = vld [vmem:[%s1 + $0x260] sm:$0xff]
    %v190 = vld [vmem:[%s1 + $0x268] sm:$0xff]
    %v191 = vld [vmem:[%s1 + $0x270] sm:$0xff]
    %v192 = vld [vmem:[%s1 + $0x278] sm:$0xff]
    %v193 = vld [vmem:[%s1 + $0x280] sm:$0xff]
    %v194 = vld [vmem:[%s1 + $0x288] sm:$0xff]
    %v195 = vld [vmem:[%s1 + $0x290] sm:$0xff]
    %v196 = vld [vmem:[%s1 + $0x298] sm:$0xff]
    %v197 = vld [vmem:[%s1 + $0x2a0] sm:$0xff]
    %v198 = vld [vmem:[%s1 + $0x2a8] sm:$0xff]
    %v199 = vld [vmem:[%s1 + $0x2b0] sm:$0xff]
    %v200 = vld [vmem:[%s1 + $0x2b8] sm:$0xff]
    %v201 = vld [vmem:[%s1 + $0x2c0] sm:$0xff]
    %v202 = vld [vmem:[%s1 + $0x2c8] sm:$0xff]
    %v203 = vld [vmem:[%s1 + $0x2d0] sm:$0xff]
    %v204 = vld [vmem:[%s1 + $0x2d8] sm:$0xff]
    %v205 = vld [vmem:[%s1 + $0x2e0] sm:$0xff]
    %v206 = vld [vmem:[%s1 + $0x2e8] sm:$0xff]
    %v207 = vld [vmem:[%s1 + $0x2f0] sm:$0xff]
    %v208 = vld [vmem:[%s1 + $0x2f8] sm:$0xff]
    %v209 = vld [vmem:[%s1 + $0x300] sm:$0xff]
    %v210 = vld [vmem:[%s1 + $0x308] sm:$0xff]
    %v211 = vld [vmem:[%s1 + $0x310] sm:$0xff]
    %v212 = vld [vmem:[%s1 + $0x318] sm:$0xff]
    %v213 = vld [vmem:[%s1 + $0x320] sm:$0xff]
    %v214 = vld [vmem:[%s1 + $0x328] sm:$0xff]
    %v215 = vld [vmem:[%s1 + $0x330] sm:$0xff]
    %v216 = vld [vmem:[%s1 + $0x338] sm:$0xff]
    %v217 = vld [vmem:[%s1 + $0x340] sm:$0xff]
    %v218 = vld [vmem:[%s1 + $0x348] sm:$0xff]
    %v219 = vld [vmem:[%s1 + $0x350] sm:$0xff]
    %v220 = vld [vmem:[%s1 + $0x358] sm:$0xff]
    %v221 = vld [vmem:[%s1 + $0x360] sm:$0xff]
    %v222 = vld [vmem:[%s1 + $0x368] sm:$0xff]
    %v223 = vld [vmem:[%s1 + $0x370] sm:$0xff]
    %v224 = vld [vmem:[%s1 + $0x378] sm:$0xff]
    %v225 = vld [vmem:[%s1 + $0x380] sm:$0xff]
    %v226 = vld [vmem:[%s1 + $0x388] sm:$0xff]
    %v227 = vld [vmem:[%s1 + $0x390] sm:$0xff]
    %v228 = vld [vmem:[%s1 + $0x398] sm:$0xff]
    %v229 = vld [vmem:[%s1 + $0x3a0] sm:$0xff]
    %v230 = vld [vmem:[%s1 + $0x3a8] sm:$0xff]
    %v231 = vld [vmem:[%s1 + $0x3b0] sm:$0xff]
    %v232 = vld [vmem:[%s1 + $0x3b8] sm:$0xff]
    %v233 = vld [vmem:[%s1 + $0x3c0] sm:$0xff]
    %v234 = vld [vmem:[%s1 + $0x3c8] sm:$0xff]
    %v235 = vld [vmem:[%s1 + $0x3d0] sm:$0xff]
    %v236 = vld [vmem:[%s1 + $0x3d8] sm:$0xff]
    %v237 = vld [vmem:[%s1 + $0x3e0] sm:$0xff]
    %v238 = vld [vmem:[%s1 + $0x3e8] sm:$0xff]
    %v239 = vld [vmem:[%s1 + $0x3f0] sm:$0xff]
    %v240 = vld [vmem:[%s1 + $0x3f8] sm:$0xff]
    %v241 = vld [vmem:[%s1 + $0x400] sm:$0xff]
    %v242 = vld [vmem:[%s1 + $0x408] sm:$0xff]
    %v243 = vld [vmem:[%s1 + $0x410] sm:$0xff]
    %v244 = vld [vmem:[%s1 + $0x418] sm:$0xff]
    %v245 = vld [vmem:[%s1 + $0x420] sm:$0xff]
    %v246 = vld [vmem:[%s1 + $0x428] sm:$0xff]
    %v247 = vld [vmem:[%s1 + $0x430] sm:$0xff]
    %v248 = vld [vmem:[%s1 + $0x438] sm:$0xff]
    %v249 = vld [vmem:[%s1 + $0x440] sm:$0xff]
    %v250 = vld [vmem:[%s1 + $0x448] sm:$0xff]
    %v251 = vld [vmem:[%s1 + $0x450] sm:$0xff]
    %v252 = vld [vmem:[%s1 + $0x458] sm:$0xff]
    %v253 = vld [vmem:[%s1 + $0x460] sm:$0xff]
    %v254 = vld [vmem:[%s1 + $0x468] sm:$0xff]
    %v255 = vld [vmem:[%s1 + $0x470] sm:$0xff]
    %v256 = vld [vmem:[%s1 + $0x478] sm:$0xff]
    %v257 = vld [vmem:[%s1 + $0x480] sm:$0xff]
    %v258 = vld [vmem:[%s1 + $0x488] sm:$0xff]
    %v259 = vld [vmem:[%s1 + $0x490] sm:$0xff]
    %v260 = vld [vmem:[%s1 + $0x498] sm:$0xff]
    %v261 = vld [vmem:[%s1 + $0x4a0] sm:$0xff]
    %v262 = vld [vmem:[%s1 + $0x4a8] sm:$0xff]
    %v263 = vld [vmem:[%s1 + $0x4b0] sm:$0xff]
    %v264 = vld [vmem:[%s1 + $0x4b8] sm:$0xff]
    %v265 = vld [vmem:[%s1 + $0x4c0] sm:$0xff]
    %v266 = vld [vmem:[%s1 + $0x4c8] sm:$0xff]
    %v267 = vld [vmem:[%s1 + $0x4d0] sm:$0xff]
    %v268 = vld [vmem:[%s1 + $0x4d8] sm:$0xff]
    %v269 = vld [vmem:[%s1 + $0x4e0] sm:$0xff]
    %v270 = vld [vmem:[%s1 + $0x4e8] sm:$0xff]
    %v271 = vld [vmem:[%s1 + $0x4f0] sm:$0xff]
    %v272 = vld [vmem:[%s1 + $0x4f8] sm:$0xff]
    %v273 = vld [vmem:[%s1 + $0x500] sm:$0xff]
    %v274 = vld [vmem:[%s1 + $0x508] sm:$0xff]
    %v275 = vld [vmem:[%s1 + $0x510] sm:$0xff]
    %v276 = vld [vmem:[%s1 + $0x518] sm:$0xff]
    %v277 = vld [vmem:[%s1 + $0x520] sm:$0xff]
    %v278 = vld [vmem:[%s1 + $0x528] sm:$0xff]
    %v279 = vld [vmem:[%s1 + $0x530] sm:$0xff]
    %v280 = vld [vmem:[%s1 + $0x538] sm:$0xff]
    %v281 = vld [vmem:[%s1 + $0x540] sm:$0xff]
    %v282 = vld [vmem:[%s1 + $0x548] sm:$0xff]
    %v283 = vld [vmem:[%s1 + $0x550] sm:$0xff]
    %v284 = vld [vmem:[%s1 + $0x558] sm:$0xff]
    %v285 = vld [vmem:[%s1 + $0x560] sm:$0xff]
    %v286 = vld [vmem:[%s1 + $0x568] sm:$0xff]
    %v287 = vld [vmem:[%s1 + $0x570] sm:$0xff]
    %v288 = vld [vmem:[%s1 + $0x578] sm:$0xff]
    %v289 = vld [vmem:[%s1 + $0x580] sm:$0xff]
    %v290 = vld [vmem:[%s1 + $0x588] sm:$0xff]
    %v291 = vld [vmem:[%s1 + $0x590] sm:$0xff]
    %v292 = vld [vmem:[%s1 + $0x598] sm:$0xff]
    %v293 = vld [vmem:[%s1 + $0x5a0] sm:$0xff]
    %v294 = vld [vmem:[%s1 + $0x5a8] sm:$0xff]
    %v295 = vld [vmem:[%s1 + $0x5b0] sm:$0xff]
    %v296 = vld [vmem:[%s1 + $0x5b8] sm:$0xff]
    %v297 = vld [vmem:[%s1 + $0x5c0] sm:$0xff]
    %v298 = vld [vmem:[%s1 + $0x5c8] sm:$0xff]
    %v299 = vld [vmem:[%s1 + $0x5d0] sm:$0xff]
    %v300 = vld [vmem:[%s1 + $0x5d8] sm:$0xff]
    %v301 = vld [vmem:[%s1 + $0x5e0] sm:$0xff]
    %v302 = vld [vmem:[%s1 + $0x5e8] sm:$0xff]
    %v303 = vld [vmem:[%s1 + $0x5f0] sm:$0xff]
    %v304 = vld [vmem:[%s1 + $0x5f8] sm:$0xff]
    %v305 = vld [vmem:[%s1 + $0x600] sm:$0xff]
    %v306 = vld [vmem:[%s1 + $0x608] sm:$0xff]
    %v307 = vld [vmem:[%s1 + $0x610] sm:$0xff]
    %v308 = vld [vmem:[%s1 + $0x618] sm:$0xff]
    %v309 = vld [vmem:[%s2] sm:$0xf]
    %v311 = vlaneseq
    %v312 = vshrl.u32 %v311, 7
    %v313 = vsub.s32 0, %v312
    %v314 = vrot.slane %v309, %v313
    %v315 = vlaneseq
    %v316 = vshrl.u32 %v315, 7
    %v317 = vsub.s32 1, %v316
    %v318 = vrot.slane %v309, %v317
    %v319 = vlaneseq
    %v320 = vshrl.u32 %v319, 7
    %v321 = vsub.s32 2, %v320
    %v322 = vrot.slane %v309, %v321
    %v323 = vlaneseq
    %v324 = vshrl.u32 %v323, 7
    %v325 = vsub.s32 3, %v324
    %v326 = vrot.slane %v309, %v325
    %v527 = vunpack.c.l.b16 %v113
    %v528 = vunpack.c.h.b16 %v113
    %v529 = vunpack.c.l.b16 %v114
    %v530 = vunpack.c.h.b16 %v114
    %v531 = vunpack.c.l.b16 %v115
    %v532 = vunpack.c.h.b16 %v115
    %v533 = vunpack.c.l.b16 %v116
    %v534 = vunpack.c.h.b16 %v116
    %v535 = vunpack.c.l.b16 %v117
    %v536 = vunpack.c.h.b16 %v117
    %v537 = vunpack.c.l.b16 %v118
    %v538 = vunpack.c.h.b16 %v118
    %v539 = vunpack.c.l.b16 %v119
    %v540 = vunpack.c.h.b16 %v119
    %v541 = vunpack.c.l.b16 %v120
    %v542 = vunpack.c.h.b16 %v120
    %v543 = vunpack.c.l.b16 %v121
    %v544 = vunpack.c.h.b16 %v121
    %v545 = vunpack.c.l.b16 %v122
    %v546 = vunpack.c.h.b16 %v122
    %v547 = vunpack.c.l.b16 %v123
    %v548 = vunpack.c.h.b16 %v123
    %v549 = vunpack.c.l.b16 %v124
    %v550 = vunpack.c.h.b16 %v124
    %v551 = vunpack.c.l.b16 %v125
    %v552 = vunpack.c.h.b16 %v125
    %v553 = vunpack.c.l.b16 %v126
    %v554 = vunpack.c.h.b16 %v126
    %v555 = vunpack.c.l.b16 %v127
    %v556 = vunpack.c.h.b16 %v127
    %v557 = vunpack.c.l.b16 %v128
    %v558 = vunpack.c.h.b16 %v128
    %v559 = vunpack.c.l.b16 %v129
    %v560 = vunpack.c.h.b16 %v129
    %v561 = vunpack.c.l.b16 %v130
    %v562 = vunpack.c.h.b16 %v130
    %v563 = vunpack.c.l.b16 %v131
    %v564 = vunpack.c.h.b16 %v131
    %v565 = vunpack.c.l.b16 %v132
    %v566 = vunpack.c.h.b16 %v132
    %v567 = vunpack.c.l.b16 %v133
    %v568 = vunpack.c.h.b16 %v133
    %v569 = vunpack.c.l.b16 %v134
    %v570 = vunpack.c.h.b16 %v134
    %v571 = vunpack.c.l.b16 %v135
    %v572 = vunpack.c.h.b16 %v135
    %v573 = vunpack.c.l.b16 %v136
    %v574 = vunpack.c.h.b16 %v136
    %v575 = vunpack.c.l.b16 %v137
    %v576 = vunpack.c.h.b16 %v137
    %v577 = vunpack.c.l.b16 %v138
    %v578 = vunpack.c.h.b16 %v138
    %v579 = vunpack.c.l.b16 %v139
    %v580 = vunpack.c.h.b16 %v139
    %v581 = vunpack.c.l.b16 %v140
    %v582 = vunpack.c.h.b16 %v140
    %v583 = vunpack.c.l.b16 %v141
    %v584 = vunpack.c.h.b16 %v141
    %v585 = vunpack.c.l.b16 %v142
    %v586 = vunpack.c.h.b16 %v142
    %v587 = vunpack.c.l.b16 %v143
    %v588 = vunpack.c.h.b16 %v143
    %v589 = vunpack.c.l.b16 %v144
    %v590 = vunpack.c.h.b16 %v144
    %v591 = vunpack.c.l.b16 %v145
    %v592 = vunpack.c.h.b16 %v145
    %v593 = vunpack.c.l.b16 %v146
    %v594 = vunpack.c.h.b16 %v146
    %v595 = vunpack.c.l.b16 %v147
    %v596 = vunpack.c.h.b16 %v147
    %v597 = vunpack.c.l.b16 %v148
    %v598 = vunpack.c.h.b16 %v148
    %v599 = vunpack.c.l.b16 %v149
    %v600 = vunpack.c.h.b16 %v149
    %v601 = vunpack.c.l.b16 %v150
    %v602 = vunpack.c.h.b16 %v150
    %v603 = vunpack.c.l.b16 %v151
    %v604 = vunpack.c.h.b16 %v151
    %v605 = vunpack.c.l.b16 %v152
    %v606 = vunpack.c.h.b16 %v152
    %v607 = vunpack.c.l.b16 %v153
    %v608 = vunpack.c.h.b16 %v153
    %v609 = vunpack.c.l.b16 %v154
    %v610 = vunpack.c.h.b16 %v154
    %v611 = vunpack.c.l.b16 %v155
    %v612 = vunpack.c.h.b16 %v155
    %v613 = vunpack.c.l.b16 %v156
    %v614 = vunpack.c.h.b16 %v156
    %v615 = vunpack.c.l.b16 %v157
    %v616 = vunpack.c.h.b16 %v157
    %v617 = vunpack.c.l.b16 %v158
    %v618 = vunpack.c.h.b16 %v158
    %v619 = vunpack.c.l.b16 %v159
    %v620 = vunpack.c.h.b16 %v159
    %v621 = vunpack.c.l.b16 %v160
    %v622 = vunpack.c.h.b16 %v160
    %v623 = vunpack.c.l.b16 %v161
    %v624 = vunpack.c.h.b16 %v161
    %v625 = vunpack.c.l.b16 %v162
    %v626 = vunpack.c.h.b16 %v162
    %v627 = vunpack.c.l.b16 %v163
    %v628 = vunpack.c.h.b16 %v163
    %v629 = vunpack.c.l.b16 %v164
    %v630 = vunpack.c.h.b16 %v164
    %v631 = vunpack.c.l.b16 %v165
    %v632 = vunpack.c.h.b16 %v165
    %v633 = vunpack.c.l.b16 %v166
    %v634 = vunpack.c.h.b16 %v166
    %v635 = vunpack.c.l.b16 %v167
    %v636 = vunpack.c.h.b16 %v167
    %v637 = vunpack.c.l.b16 %v168
    %v638 = vunpack.c.h.b16 %v168
    %v639 = vunpack.c.l.b16 %v169
    %v640 = vunpack.c.h.b16 %v169
    %v641 = vunpack.c.l.b16 %v170
    %v642 = vunpack.c.h.b16 %v170
    %v643 = vunpack.c.l.b16 %v171
    %v644 = vunpack.c.h.b16 %v171
    %v645 = vunpack.c.l.b16 %v172
    %v646 = vunpack.c.h.b16 %v172
    %v647 = vunpack.c.l.b16 %v173
    %v648 = vunpack.c.h.b16 %v173
    %v649 = vunpack.c.l.b16 %v174
    %v650 = vunpack.c.h.b16 %v174
    %v651 = vunpack.c.l.b16 %v175
    %v652 = vunpack.c.h.b16 %v175
    %v653 = vunpack.c.l.b16 %v176
    %v654 = vunpack.c.h.b16 %v176
    %v655 = vunpack.c.l.b16 %v177
    %v656 = vunpack.c.h.b16 %v177
    %v657 = vunpack.c.l.b16 %v178
    %v658 = vunpack.c.h.b16 %v178
    %v659 = vunpack.c.l.b16 %v179
    %v660 = vunpack.c.h.b16 %v179
    %v661 = vunpack.c.l.b16 %v180
    %v662 = vunpack.c.h.b16 %v180
    %v663 = vunpack.c.l.b16 %v181
    %v664 = vunpack.c.h.b16 %v181
    %v665 = vunpack.c.l.b16 %v182
    %v666 = vunpack.c.h.b16 %v182
    %v667 = vunpack.c.l.b16 %v183
    %v668 = vunpack.c.h.b16 %v183
    %v669 = vunpack.c.l.b16 %v184
    %v670 = vunpack.c.h.b16 %v184
    %v671 = vunpack.c.l.b16 %v185
    %v672 = vunpack.c.h.b16 %v185
    %v673 = vunpack.c.l.b16 %v186
    %v674 = vunpack.c.h.b16 %v186
    %v675 = vunpack.c.l.b16 %v187
    %v676 = vunpack.c.h.b16 %v187
    %v677 = vunpack.c.l.b16 %v188
    %v678 = vunpack.c.h.b16 %v188
    %v679 = vunpack.c.l.b16 %v189
    %v680 = vunpack.c.h.b16 %v189
    %v681 = vunpack.c.l.b16 %v190
    %v682 = vunpack.c.h.b16 %v190
    %v683 = vunpack.c.l.b16 %v191
    %v684 = vunpack.c.h.b16 %v191
    %v685 = vunpack.c.l.b16 %v192
    %v686 = vunpack.c.h.b16 %v192
    %v687 = vunpack.c.l.b16 %v193
    %v688 = vunpack.c.h.b16 %v193
    %v689 = vunpack.c.l.b16 %v194
    %v690 = vunpack.c.h.b16 %v194
    %v691 = vunpack.c.l.b16 %v195
    %v692 = vunpack.c.h.b16 %v195
    %v693 = vunpack.c.l.b16 %v196
    %v694 = vunpack.c.h.b16 %v196
    %v695 = vunpack.c.l.b16 %v197
    %v696 = vunpack.c.h.b16 %v197
    %v697 = vunpack.c.l.b16 %v198
    %v698 = vunpack.c.h.b16 %v198
    %v699 = vunpack.c.l.b16 %v199
    %v700 = vunpack.c.h.b16 %v199
    %v701 = vunpack.c.l.b16 %v200
    %v702 = vunpack.c.h.b16 %v200
    %v703 = vunpack.c.l.b16 %v201
    %v704 = vunpack.c.h.b16 %v201
    %v705 = vunpack.c.l.b16 %v202
    %v706 = vunpack.c.h.b16 %v202
    %v707 = vunpack.c.l.b16 %v203
    %v708 = vunpack.c.h.b16 %v203
    %v709 = vunpack.c.l.b16 %v204
    %v710 = vunpack.c.h.b16 %v204
    %v711 = vunpack.c.l.b16 %v205
    %v712 = vunpack.c.h.b16 %v205
    %v713 = vunpack.c.l.b16 %v206
    %v714 = vunpack.c.h.b16 %v206
    %v715 = vunpack.c.l.b16 %v207
    %v716 = vunpack.c.h.b16 %v207
    %v717 = vunpack.c.l.b16 %v208
    %v718 = vunpack.c.h.b16 %v208
    %v719 = vunpack.c.l.b16 %v209
    %v720 = vunpack.c.h.b16 %v209
    %v721 = vunpack.c.l.b16 %v210
    %v722 = vunpack.c.h.b16 %v210
    %v723 = vunpack.c.l.b16 %v211
    %v724 = vunpack.c.h.b16 %v211
    %v725 = vunpack.c.l.b16 %v212
    %v726 = vunpack.c.h.b16 %v212
    %v727 = vunpack.c.l.b16 %v213
    %v728 = vunpack.c.h.b16 %v213
    %v729 = vunpack.c.l.b16 %v214
    %v730 = vunpack.c.h.b16 %v214
    %v731 = vunpack.c.l.b16 %v215
    %v732 = vunpack.c.h.b16 %v215
    %v733 = vunpack.c.l.b16 %v216
    %v734 = vunpack.c.h.b16 %v216
    %v735 = vunpack.c.l.b16 %v217
    %v736 = vunpack.c.h.b16 %v217
    %v737 = vunpack.c.l.b16 %v218
    %v738 = vunpack.c.h.b16 %v218
    %v739 = vunpack.c.l.b16 %v219
    %v740 = vunpack.c.h.b16 %v219
    %v741 = vunpack.c.l.b16 %v220
    %v742 = vunpack.c.h.b16 %v220
    %v743 = vunpack.c.l.b16 %v221
    %v744 = vunpack.c.h.b16 %v221
    %v745 = vunpack.c.l.b16 %v222
    %v746 = vunpack.c.h.b16 %v222
    %v747 = vunpack.c.l.b16 %v223
    %v748 = vunpack.c.h.b16 %v223
    %v749 = vunpack.c.l.b16 %v224
    %v750 = vunpack.c.h.b16 %v224
    %v751 = vunpack.c.l.b16 %v225
    %v752 = vunpack.c.h.b16 %v225
    %v753 = vunpack.c.l.b16 %v226
    %v754 = vunpack.c.h.b16 %v226
    %v755 = vunpack.c.l.b16 %v227
    %v756 = vunpack.c.h.b16 %v227
    %v757 = vunpack.c.l.b16 %v228
    %v758 = vunpack.c.h.b16 %v228
    %v759 = vunpack.c.l.b16 %v229
    %v760 = vunpack.c.h.b16 %v229
    %v761 = vunpack.c.l.b16 %v230
    %v762 = vunpack.c.h.b16 %v230
    %v763 = vunpack.c.l.b16 %v231
    %v764 = vunpack.c.h.b16 %v231
    %v765 = vunpack.c.l.b16 %v232
    %v766 = vunpack.c.h.b16 %v232
    %v767 = vunpack.c.l.b16 %v233
    %v768 = vunpack.c.h.b16 %v233
    %v769 = vunpack.c.l.b16 %v234
    %v770 = vunpack.c.h.b16 %v234
    %v771 = vunpack.c.l.b16 %v235
    %v772 = vunpack.c.h.b16 %v235
    %v773 = vunpack.c.l.b16 %v236
    %v774 = vunpack.c.h.b16 %v236
    %v775 = vunpack.c.l.b16 %v237
    %v776 = vunpack.c.h.b16 %v237
    %v777 = vunpack.c.l.b16 %v238
    %v778 = vunpack.c.h.b16 %v238
    %v779 = vunpack.c.l.b16 %v239
    %v780 = vunpack.c.h.b16 %v239
    %v781 = vunpack.c.l.b16 %v240
    %v782 = vunpack.c.h.b16 %v240
    %v783 = vunpack.c.l.b16 %v241
    %v784 = vunpack.c.h.b16 %v241
    %v785 = vunpack.c.l.b16 %v242
    %v786 = vunpack.c.h.b16 %v242
    %v787 = vunpack.c.l.b16 %v243
    %v788 = vunpack.c.h.b16 %v243
    %v789 = vunpack.c.l.b16 %v244
    %v790 = vunpack.c.h.b16 %v244
    %v791 = vunpack.c.l.b16 %v245
    %v792 = vunpack.c.h.b16 %v245
    %v793 = vunpack.c.l.b16 %v246
    %v794 = vunpack.c.h.b16 %v246
    %v795 = vunpack.c.l.b16 %v247
    %v796 = vunpack.c.h.b16 %v247
    %v797 = vunpack.c.l.b16 %v248
    %v798 = vunpack.c.h.b16 %v248
    %v799 = vunpack.c.l.b16 %v249
    %v800 = vunpack.c.h.b16 %v249
    %v801 = vunpack.c.l.b16 %v250
    %v802 = vunpack.c.h.b16 %v250
    %v803 = vunpack.c.l.b16 %v251
    %v804 = vunpack.c.h.b16 %v251
    %v805 = vunpack.c.l.b16 %v252
    %v806 = vunpack.c.h.b16 %v252
    %v807 = vunpack.c.l.b16 %v253
    %v808 = vunpack.c.h.b16 %v253
    %v809 = vunpack.c.l.b16 %v254
    %v810 = vunpack.c.h.b16 %v254
    %v811 = vunpack.c.l.b16 %v255
    %v812 = vunpack.c.h.b16 %v255
    %v813 = vunpack.c.l.b16 %v256
    %v814 = vunpack.c.h.b16 %v256
    %v815 = vunpack.c.l.b16 %v257
    %v816 = vunpack.c.h.b16 %v257
    %v817 = vunpack.c.l.b16 %v258
    %v818 = vunpack.c.h.b16 %v258
    %v819 = vunpack.c.l.b16 %v259
    %v820 = vunpack.c.h.b16 %v259
    %v821 = vunpack.c.l.b16 %v260
    %v822 = vunpack.c.h.b16 %v260
    %v823 = vunpack.c.l.b16 %v261
    %v824 = vunpack.c.h.b16 %v261
    %v825 = vunpack.c.l.b16 %v262
    %v826 = vunpack.c.h.b16 %v262
    %v827 = vunpack.c.l.b16 %v263
    %v828 = vunpack.c.h.b16 %v263
    %v829 = vunpack.c.l.b16 %v264
    %v830 = vunpack.c.h.b16 %v264
    %v831 = vunpack.c.l.b16 %v265
    %v832 = vunpack.c.h.b16 %v265
    %v833 = vunpack.c.l.b16 %v266
    %v834 = vunpack.c.h.b16 %v266
    %v835 = vunpack.c.l.b16 %v267
    %v836 = vunpack.c.h.b16 %v267
    %v837 = vunpack.c.l.b16 %v268
    %v838 = vunpack.c.h.b16 %v268
    %v839 = vunpack.c.l.b16 %v269
    %v840 = vunpack.c.h.b16 %v269
    %v841 = vunpack.c.l.b16 %v270
    %v842 = vunpack.c.h.b16 %v270
    %v843 = vunpack.c.l.b16 %v271
    %v844 = vunpack.c.h.b16 %v271
    %v845 = vunpack.c.l.b16 %v272
    %v846 = vunpack.c.h.b16 %v272
    %v847 = vunpack.c.l.b16 %v273
    %v848 = vunpack.c.h.b16 %v273
    %v849 = vunpack.c.l.b16 %v274
    %v850 = vunpack.c.h.b16 %v274
    %v851 = vunpack.c.l.b16 %v275
    %v852 = vunpack.c.h.b16 %v275
    %v853 = vunpack.c.l.b16 %v276
    %v854 = vunpack.c.h.b16 %v276
    %v855 = vunpack.c.l.b16 %v277
    %v856 = vunpack.c.h.b16 %v277
    %v857 = vunpack.c.l.b16 %v278
    %v858 = vunpack.c.h.b16 %v278
    %v859 = vunpack.c.l.b16 %v279
    %v860 = vunpack.c.h.b16 %v279
    %v861 = vunpack.c.l.b16 %v280
    %v862 = vunpack.c.h.b16 %v280
    %v863 = vunpack.c.l.b16 %v281
    %v864 = vunpack.c.h.b16 %v281
    %v865 = vunpack.c.l.b16 %v282
    %v866 = vunpack.c.h.b16 %v282
    %v867 = vunpack.c.l.b16 %v283
    %v868 = vunpack.c.h.b16 %v283
    %v869 = vunpack.c.l.b16 %v284
    %v870 = vunpack.c.h.b16 %v284
    %v871 = vunpack.c.l.b16 %v285
    %v872 = vunpack.c.h.b16 %v285
    %v873 = vunpack.c.l.b16 %v286
    %v874 = vunpack.c.h.b16 %v286
    %v875 = vunpack.c.l.b16 %v287
    %v876 = vunpack.c.h.b16 %v287
    %v877 = vunpack.c.l.b16 %v288
    %v878 = vunpack.c.h.b16 %v288
    %v879 = vunpack.c.l.b16 %v289
    %v880 = vunpack.c.h.b16 %v289
    %v881 = vunpack.c.l.b16 %v290
    %v882 = vunpack.c.h.b16 %v290
    %v883 = vunpack.c.l.b16 %v291
    %v884 = vunpack.c.h.b16 %v291
    %v885 = vunpack.c.l.b16 %v292
    %v886 = vunpack.c.h.b16 %v292
    %v887 = vunpack.c.l.b16 %v293
    %v888 = vunpack.c.h.b16 %v293
    %v889 = vunpack.c.l.b16 %v294
    %v890 = vunpack.c.h.b16 %v294
    %v891 = vunpack.c.l.b16 %v295
    %v892 = vunpack.c.h.b16 %v295
    %v893 = vunpack.c.l.b16 %v296
    %v894 = vunpack.c.h.b16 %v296
    %v895 = vunpack.c.l.b16 %v297
    %v896 = vunpack.c.h.b16 %v297
    %v897 = vunpack.c.l.b16 %v298
    %v898 = vunpack.c.h.b16 %v298
    %v899 = vunpack.c.l.b16 %v299
    %v900 = vunpack.c.h.b16 %v299
    %v901 = vunpack.c.l.b16 %v300
    %v902 = vunpack.c.h.b16 %v300
    %v903 = vunpack.c.l.b16 %v301
    %v904 = vunpack.c.h.b16 %v301
    %v905 = vunpack.c.l.b16 %v302
    %v906 = vunpack.c.h.b16 %v302
    %v907 = vunpack.c.l.b16 %v303
    %v908 = vunpack.c.h.b16 %v303
    %v909 = vunpack.c.l.b16 %v304
    %v910 = vunpack.c.h.b16 %v304
    %v911 = vunpack.c.l.b16 %v305
    %v912 = vunpack.c.h.b16 %v305
    %v913 = vunpack.c.l.b16 %v306
    %v914 = vunpack.c.h.b16 %v306
    %v915 = vunpack.c.l.b16 %v307
    %v916 = vunpack.c.h.b16 %v307
    %v917 = vunpack.c.l.b16 %v308
    %v918 = vunpack.c.h.b16 %v308
    %v919 = vpack.c.b16 %v531, %v527
    %v920 = vpack.c.b16 %v532, %v528
    %v921 = vpack.c.b16 %v533, %v529
    %v922 = vpack.c.b16 %v534, %v530
    %v923 = vpack.c.b16 %v539, %v535
    %v924 = vpack.c.b16 %v540, %v536
    %v925 = vpack.c.b16 %v541, %v537
    %v926 = vpack.c.b16 %v542, %v538
    %v927 = vpack.c.b16 %v547, %v543
    %v928 = vpack.c.b16 %v548, %v544
    %v929 = vpack.c.b16 %v549, %v545
    %v930 = vpack.c.b16 %v550, %v546
    %v931 = vpack.c.b16 %v555, %v551
    %v932 = vpack.c.b16 %v556, %v552
    %v933 = vpack.c.b16 %v557, %v553
    %v934 = vpack.c.b16 %v558, %v554
    %v935 = vpack.c.b16 %v563, %v559
    %v936 = vpack.c.b16 %v564, %v560
    %v937 = vpack.c.b16 %v565, %v561
    %v938 = vpack.c.b16 %v566, %v562
    %v939 = vpack.c.b16 %v571, %v567
    %v940 = vpack.c.b16 %v572, %v568
    %v941 = vpack.c.b16 %v573, %v569
    %v942 = vpack.c.b16 %v574, %v570
    %v943 = vpack.c.b16 %v579, %v575
    %v944 = vpack.c.b16 %v580, %v576
    %v945 = vpack.c.b16 %v581, %v577
    %v946 = vpack.c.b16 %v582, %v578
    %v947 = vpack.c.b16 %v587, %v583
    %v948 = vpack.c.b16 %v588, %v584
    %v949 = vpack.c.b16 %v589, %v585
    %v950 = vpack.c.b16 %v590, %v586
    %v951 = vpack.c.b16 %v595, %v591
    %v952 = vpack.c.b16 %v596, %v592
    %v953 = vpack.c.b16 %v597, %v593
    %v954 = vpack.c.b16 %v598, %v594
    %v955 = vpack.c.b16 %v603, %v599
    %v956 = vpack.c.b16 %v604, %v600
    %v957 = vpack.c.b16 %v605, %v601
    %v958 = vpack.c.b16 %v606, %v602
    %v959 = vpack.c.b16 %v611, %v607
    %v960 = vpack.c.b16 %v612, %v608
    %v961 = vpack.c.b16 %v613, %v609
    %v962 = vpack.c.b16 %v614, %v610
    %v963 = vpack.c.b16 %v619, %v615
    %v964 = vpack.c.b16 %v620, %v616
    %v965 = vpack.c.b16 %v621, %v617
    %v966 = vpack.c.b16 %v622, %v618
    %v967 = vpack.c.b16 %v627, %v623
    %v968 = vpack.c.b16 %v628, %v624
    %v969 = vpack.c.b16 %v629, %v625
    %v970 = vpack.c.b16 %v630, %v626
    %v971 = vpack.c.b16 %v635, %v631
    %v972 = vpack.c.b16 %v636, %v632
    %v973 = vpack.c.b16 %v637, %v633
    %v974 = vpack.c.b16 %v638, %v634
    %v975 = vpack.c.b16 %v643, %v639
    %v976 = vpack.c.b16 %v644, %v640
    %v977 = vpack.c.b16 %v645, %v641
    %v978 = vpack.c.b16 %v646, %v642
    %v979 = vpack.c.b16 %v651, %v647
    %v980 = vpack.c.b16 %v652, %v648
    %v981 = vpack.c.b16 %v653, %v649
    %v982 = vpack.c.b16 %v654, %v650
    %v983 = vpack.c.b16 %v659, %v655
    %v984 = vpack.c.b16 %v660, %v656
    %v985 = vpack.c.b16 %v661, %v657
    %v986 = vpack.c.b16 %v662, %v658
    %v987 = vpack.c.b16 %v667, %v663
    %v988 = vpack.c.b16 %v668, %v664
    %v989 = vpack.c.b16 %v669, %v665
    %v990 = vpack.c.b16 %v670, %v666
    %v991 = vpack.c.b16 %v675, %v671
    %v992 = vpack.c.b16 %v676, %v672
    %v993 = vpack.c.b16 %v677, %v673
    %v994 = vpack.c.b16 %v678, %v674
    %v995 = vpack.c.b16 %v683, %v679
    %v996 = vpack.c.b16 %v684, %v680
    %v997 = vpack.c.b16 %v685, %v681
    %v998 = vpack.c.b16 %v686, %v682
    %v999 = vpack.c.b16 %v691, %v687
    %v1000 = vpack.c.b16 %v692, %v688
    %v1001 = vpack.c.b16 %v693, %v689
    %v1002 = vpack.c.b16 %v694, %v690
    %v1003 = vpack.c.b16 %v699, %v695
    %v1004 = vpack.c.b16 %v700, %v696
    %v1005 = vpack.c.b16 %v701, %v697
    %v1006 = vpack.c.b16 %v702, %v698
    %v1007 = vpack.c.b16 %v707, %v703
    %v1008 = vpack.c.b16 %v708, %v704
    %v1009 = vpack.c.b16 %v709, %v705
    %v1010 = vpack.c.b16 %v710, %v706
    %v1011 = vpack.c.b16 %v715, %v711
    %v1012 = vpack.c.b16 %v716, %v712
    %v1013 = vpack.c.b16 %v717, %v713
    %v1014 = vpack.c.b16 %v718, %v714
    %v1015 = vpack.c.b16 %v723, %v719
    %v1016 = vpack.c.b16 %v724, %v720
    %v1017 = vpack.c.b16 %v725, %v721
    %v1018 = vpack.c.b16 %v726, %v722
    %v1019 = vpack.c.b16 %v731, %v727
    %v1020 = vpack.c.b16 %v732, %v728
    %v1021 = vpack.c.b16 %v733, %v729
    %v1022 = vpack.c.b16 %v734, %v730
    %v1023 = vpack.c.b16 %v739, %v735
    %v1024 = vpack.c.b16 %v740, %v736
    %v1025 = vpack.c.b16 %v741, %v737
    %v1026 = vpack.c.b16 %v742, %v738
    %v1027 = vpack.c.b16 %v747, %v743
    %v1028 = vpack.c.b16 %v748, %v744
    %v1029 = vpack.c.b16 %v749, %v745
    %v1030 = vpack.c.b16 %v750, %v746
    %v1031 = vpack.c.b16 %v755, %v751
    %v1032 = vpack.c.b16 %v756, %v752
    %v1033 = vpack.c.b16 %v757, %v753
    %v1034 = vpack.c.b16 %v758, %v754
    %v1035 = vpack.c.b16 %v763, %v759
    %v1036 = vpack.c.b16 %v764, %v760
    %v1037 = vpack.c.b16 %v765, %v761
    %v1038 = vpack.c.b16 %v766, %v762
    %v1039 = vpack.c.b16 %v771, %v767
    %v1040 = vpack.c.b16 %v772, %v768
    %v1041 = vpack.c.b16 %v773, %v769
    %v1042 = vpack.c.b16 %v774, %v770
    %v1043 = vpack.c.b16 %v779, %v775
    %v1044 = vpack.c.b16 %v780, %v776
    %v1045 = vpack.c.b16 %v781, %v777
    %v1046 = vpack.c.b16 %v782, %v778
    %v1047 = vpack.c.b16 %v787, %v783
    %v1048 = vpack.c.b16 %v788, %v784
    %v1049 = vpack.c.b16 %v789, %v785
    %v1050 = vpack.c.b16 %v790, %v786
    %v1051 = vpack.c.b16 %v795, %v791
    %v1052 = vpack.c.b16 %v796, %v792
    %v1053 = vpack.c.b16 %v797, %v793
    %v1054 = vpack.c.b16 %v798, %v794
    %v1055 = vpack.c.b16 %v803, %v799
    %v1056 = vpack.c.b16 %v804, %v800
    %v1057 = vpack.c.b16 %v805, %v801
    %v1058 = vpack.c.b16 %v806, %v802
    %v1059 = vpack.c.b16 %v811, %v807
    %v1060 = vpack.c.b16 %v812, %v808
    %v1061 = vpack.c.b16 %v813, %v809
    %v1062 = vpack.c.b16 %v814, %v810
    %v1063 = vpack.c.b16 %v819, %v815
    %v1064 = vpack.c.b16 %v820, %v816
    %v1065 = vpack.c.b16 %v821, %v817
    %v1066 = vpack.c.b16 %v822, %v818
    %v1067 = vpack.c.b16 %v827, %v823
    %v1068 = vpack.c.b16 %v828, %v824
    %v1069 = vpack.c.b16 %v829, %v825
    %v1070 = vpack.c.b16 %v830, %v826
    %v1071 = vpack.c.b16 %v835, %v831
    %v1072 = vpack.c.b16 %v836, %v832
    %v1073 = vpack.c.b16 %v837, %v833
    %v1074 = vpack.c.b16 %v838, %v834
    %v1075 = vpack.c.b16 %v843, %v839
    %v1076 = vpack.c.b16 %v844, %v840
    %v1077 = vpack.c.b16 %v845, %v841
    %v1078 = vpack.c.b16 %v846, %v842
    %v1079 = vpack.c.b16 %v851, %v847
    %v1080 = vpack.c.b16 %v852, %v848
    %v1081 = vpack.c.b16 %v853, %v849
    %v1082 = vpack.c.b16 %v854, %v850
    %v1083 = vpack.c.b16 %v859, %v855
    %v1084 = vpack.c.b16 %v860, %v856
    %v1085 = vpack.c.b16 %v861, %v857
    %v1086 = vpack.c.b16 %v862, %v858
    %v1087 = vpack.c.b16 %v867, %v863
    %v1088 = vpack.c.b16 %v868, %v864
    %v1089 = vpack.c.b16 %v869, %v865
    %v1090 = vpack.c.b16 %v870, %v866
    %v1091 = vpack.c.b16 %v875, %v871
    %v1092 = vpack.c.b16 %v876, %v872
    %v1093 = vpack.c.b16 %v877, %v873
    %v1094 = vpack.c.b16 %v878, %v874
    %v1095 = vpack.c.b16 %v883, %v879
    %v1096 = vpack.c.b16 %v884, %v880
    %v1097 = vpack.c.b16 %v885, %v881
    %v1098 = vpack.c.b16 %v886, %v882
    %v1099 = vpack.c.b16 %v891, %v887
    %v1100 = vpack.c.b16 %v892, %v888
    %v1101 = vpack.c.b16 %v893, %v889
    %v1102 = vpack.c.b16 %v894, %v890
    %v1103 = vpack.c.b16 %v899, %v895
    %v1104 = vpack.c.b16 %v900, %v896
    %v1105 = vpack.c.b16 %v901, %v897
    %v1106 = vpack.c.b16 %v902, %v898
    %v1107 = vpack.c.b16 %v907, %v903
    %v1108 = vpack.c.b16 %v908, %v904
    %v1109 = vpack.c.b16 %v909, %v905
    %v1110 = vpack.c.b16 %v910, %v906
    %v1111 = vpack.c.b16 %v915, %v911
    %v1112 = vpack.c.b16 %v916, %v912
    %v1113 = vpack.c.b16 %v917, %v913
    %v1114 = vpack.c.b16 %v918, %v914
    %vm1311 = vcmask 130048
    %v1313 = vsel %vm1311, %v112, 0
    %1315 = vmatprep.subr.bf16.mxu0 %v948
    %1316 = vmatpush1.bf16.msra.mxu0 %v947
    %1317 = vmatprep.subr.bf16.mxu0 %v944
    %1318 = vmatpush1.bf16.msra.mxu0 %v943
    %1319 = vmatprep.subr.bf16.mxu0 %v940
    %1320 = vmatpush1.bf16.msra.mxu0 %v939
    %1321 = vmatprep.subr.bf16.mxu0 %v936
    %1322 = vmatpush1.bf16.msra.mxu0 %v935
    %1323 = vmatprep.subr.bf16.mxu0 %v932
    %1324 = vmatpush1.bf16.msra.mxu0 %v931
    %1325 = vmatprep.subr.bf16.mxu0 %v928
    %1326 = vmatpush1.bf16.msra.mxu0 %v927
    %1327 = vmatprep.subr.bf16.mxu0 %v924
    %1328 = vmatpush1.bf16.msra.mxu0 %v923
    %1329 = vmatprep.subr.bf16.mxu0 %v920
    %1330 = vmatpush1.bf16.msra.mxu0 %v919
    %1331 = vmatprep.subr.bf16.mxu0 %v980
    %1332 = vmatpush2.bf16.msra.mxu0 %v979
    %1333 = vmatprep.subr.bf16.mxu0 %v976
    %1334 = vmatpush2.bf16.msra.mxu0 %v975
    %1335 = vmatprep.subr.bf16.mxu0 %v972
    %1336 = vmatpush2.bf16.msra.mxu0 %v971
    %1337 = vmatprep.subr.bf16.mxu0 %v968
    %1338 = vmatpush2.bf16.msra.mxu0 %v967
    %1339 = vmatprep.subr.bf16.mxu0 %v964
    %1340 = vmatpush2.bf16.msra.mxu0 %v963
    %1341 = vmatprep.subr.bf16.mxu0 %v960
    %1342 = vmatpush2.bf16.msra.mxu0 %v959
    %1343 = vmatprep.subr.bf16.mxu0 %v956
    %1344 = vmatpush2.bf16.msra.mxu0 %v955
    %1345 = vmatprep.subr.bf16.mxu0 %v952
    %1346 = vmatpush2.bf16.msra.mxu0 %v951
    %1347 = vmatprep.mubr.bf16.mxu0 %v107
    %1348 = vmatmul.mubr.bf16.gmra.mxu0 %v106
    %v1349 = vpop.f32.mrf.mxu0
    %v1350 = vadd.f32 %v314, %v1349
    %v1351 = vpop.f32.mrf.mxu0
    %v1352 = vadd.f32 %v318, %v1351
    %v1353 = vpop.f32.mrf.mxu0
    %v1354 = vadd.f32 %v314, %v1353
    %v1355 = vpop.f32.mrf.mxu0
    %v1356 = vadd.f32 %v318, %v1355
    %1357 = vdwg.mxu0
    %1358 = vmatprep.subr.bf16.mxu0 %v1012
    %1359 = vmatpush1.bf16.msra.mxu0 %v1011
    %1360 = vmatprep.subr.bf16.mxu0 %v1008
    %1361 = vmatpush1.bf16.msra.mxu0 %v1007
    %1362 = vmatprep.subr.bf16.mxu0 %v1004
    %1363 = vmatpush1.bf16.msra.mxu0 %v1003
    %1364 = vmatprep.subr.bf16.mxu0 %v1000
    %1365 = vmatpush1.bf16.msra.mxu0 %v999
    %1366 = vmatprep.subr.bf16.mxu0 %v996
    %1367 = vmatpush1.bf16.msra.mxu0 %v995
    %1368 = vmatprep.subr.bf16.mxu0 %v992
    %1369 = vmatpush1.bf16.msra.mxu0 %v991
    %1370 = vmatprep.subr.bf16.mxu0 %v988
    %1371 = vmatpush1.bf16.msra.mxu0 %v987
    %1372 = vmatprep.subr.bf16.mxu0 %v984
    %1373 = vmatpush1.bf16.msra.mxu0 %v983
    %1374 = vmatprep.subr.bf16.mxu0 %v1044
    %1375 = vmatpush2.bf16.msra.mxu0 %v1043
    %1376 = vmatprep.subr.bf16.mxu0 %v1040
    %1377 = vmatpush2.bf16.msra.mxu0 %v1039
    %1378 = vmatprep.subr.bf16.mxu0 %v1036
    %1379 = vmatpush2.bf16.msra.mxu0 %v1035
    %1380 = vmatprep.subr.bf16.mxu0 %v1032
    %1381 = vmatpush2.bf16.msra.mxu0 %v1031
    %1382 = vmatprep.subr.bf16.mxu0 %v1028
    %1383 = vmatpush2.bf16.msra.mxu0 %v1027
    %1384 = vmatprep.subr.bf16.mxu0 %v1024
    %1385 = vmatpush2.bf16.msra.mxu0 %v1023
    %1386 = vmatprep.subr.bf16.mxu0 %v1020
    %1387 = vmatpush2.bf16.msra.mxu0 %v1019
    %1388 = vmatprep.subr.bf16.mxu0 %v1016
    %1389 = vmatpush2.bf16.msra.mxu0 %v1015
    %1390 = vmatprep.mubr.bf16.mxu0 %v109
    %1391 = vmatmul.mubr.bf16.gmra.mxu0 %v108
    %v1392 = vpop.f32.mrf.mxu0
    %v1393 = vadd.f32 %v1350, %v1392
    %v1394 = vpop.f32.mrf.mxu0
    %v1395 = vadd.f32 %v1352, %v1394
    %v1396 = vpop.f32.mrf.mxu0
    %v1397 = vadd.f32 %v1354, %v1396
    %v1398 = vpop.f32.mrf.mxu0
    %v1399 = vadd.f32 %v1356, %v1398
    %1400 = vdwg.mxu0
    %1401 = vmatprep.subr.bf16.mxu0 %v1076
    %1402 = vmatpush1.bf16.msra.mxu0 %v1075
    %1403 = vmatprep.subr.bf16.mxu0 %v1072
    %1404 = vmatpush1.bf16.msra.mxu0 %v1071
    %1405 = vmatprep.subr.bf16.mxu0 %v1068
    %1406 = vmatpush1.bf16.msra.mxu0 %v1067
    %1407 = vmatprep.subr.bf16.mxu0 %v1064
    %1408 = vmatpush1.bf16.msra.mxu0 %v1063
    %1409 = vmatprep.subr.bf16.mxu0 %v1060
    %1410 = vmatpush1.bf16.msra.mxu0 %v1059
    %1411 = vmatprep.subr.bf16.mxu0 %v1056
    %1412 = vmatpush1.bf16.msra.mxu0 %v1055
    %1413 = vmatprep.subr.bf16.mxu0 %v1052
    %1414 = vmatpush1.bf16.msra.mxu0 %v1051
    %1415 = vmatprep.subr.bf16.mxu0 %v1048
    %1416 = vmatpush1.bf16.msra.mxu0 %v1047
    %1417 = vmatprep.subr.bf16.mxu0 %v1108
    %1418 = vmatpush2.bf16.msra.mxu0 %v1107
    %1419 = vmatprep.subr.bf16.mxu0 %v1104
    %1420 = vmatpush2.bf16.msra.mxu0 %v1103
    %1421 = vmatprep.subr.bf16.mxu0 %v1100
    %1422 = vmatpush2.bf16.msra.mxu0 %v1099
    %1423 = vmatprep.subr.bf16.mxu0 %v1096
    %1424 = vmatpush2.bf16.msra.mxu0 %v1095
    %1425 = vmatprep.subr.bf16.mxu0 %v1092
    %1426 = vmatpush2.bf16.msra.mxu0 %v1091
    %1427 = vmatprep.subr.bf16.mxu0 %v1088
    %1428 = vmatpush2.bf16.msra.mxu0 %v1087
    %1429 = vmatprep.subr.bf16.mxu0 %v1084
    %1430 = vmatpush2.bf16.msra.mxu0 %v1083
    %1431 = vmatprep.subr.bf16.mxu0 %v1080
    %1432 = vmatpush2.bf16.msra.mxu0 %v1079
    %1433 = vmatprep.mubr.bf16.mxu0 %v111
    %1434 = vmatmul.mubr.bf16.gmra.mxu0 %v110
    %v1435 = vpop.f32.mrf.mxu0
    %v1436 = vadd.f32 %v1393, %v1435
    %v1437 = vpop.f32.mrf.mxu0
    %v1438 = vadd.f32 %v1395, %v1437
    %v1439 = vpop.f32.mrf.mxu0
    %v1440 = vadd.f32 %v1397, %v1439
    %v1441 = vpop.f32.mrf.mxu0
    %v1442 = vadd.f32 %v1399, %v1441
    %1443 = vdwg.mxu0
    %1444 = vmatprep.subr.bf16.mxu0 0
    %1445 = vmatpush1.bf16.msra.mxu0 0
    %1446 = vmatprep.subr.bf16.mxu0 0
    %1447 = vmatpush1.bf16.msra.mxu0 0
    %1448 = vmatprep.subr.bf16.mxu0 0
    %1449 = vmatpush1.bf16.msra.mxu0 0
    %1450 = vmatprep.subr.bf16.mxu0 0
    %1451 = vmatpush1.bf16.msra.mxu0 0
    %1452 = vmatprep.subr.bf16.mxu0 0
    %1453 = vmatpush1.bf16.msra.mxu0 0
    %1454 = vmatprep.subr.bf16.mxu0 0
    %1455 = vmatpush1.bf16.msra.mxu0 0
    %1456 = vmatprep.subr.bf16.mxu0 0
    %1457 = vmatpush1.bf16.msra.mxu0 0
    %1458 = vmatprep.subr.bf16.mxu0 %v1112
    %1459 = vmatpush1.bf16.msra.mxu0 %v1111
    %1460 = vmatprep.subr.bf16.mxu0 0
    %1461 = vmatpush2.bf16.msra.mxu0 0
    %1462 = vmatprep.subr.bf16.mxu0 0
    %1463 = vmatpush2.bf16.msra.mxu0 0
    %1464 = vmatprep.subr.bf16.mxu0 0
    %1465 = vmatpush2.bf16.msra.mxu0 0
    %1466 = vmatprep.subr.bf16.mxu0 0
    %1467 = vmatpush2.bf16.msra.mxu0 0
    %1468 = vmatprep.subr.bf16.mxu0 0
    %1469 = vmatpush2.bf16.msra.mxu0 0
    %1470 = vmatprep.subr.bf16.mxu0 0
    %1471 = vmatpush2.bf16.msra.mxu0 0
    %1472 = vmatprep.subr.bf16.mxu0 0
    %1473 = vmatpush2.bf16.msra.mxu0 0
    %1474 = vmatprep.subr.bf16.mxu0 0
    %1475 = vmatpush2.bf16.msra.mxu0 0
    %1476 = vmatprep.mubr.bf16.mxu0 0
    %1477 = vmatmul.mubr.bf16.gmra.mxu0 %v1313
    %v1478 = vpop.f32.mrf.mxu0
    %v1479 = vadd.f32 %v1436, %v1478
    %v1480 = vpop.f32.mrf.mxu0
    %v1481 = vadd.f32 %v1438, %v1480
    %v1482 = vpop.f32.mrf.mxu0
    %v1483 = vadd.f32 %v1440, %v1482
    %v1484 = vpop.f32.mrf.mxu0
    %v1485 = vadd.f32 %v1442, %v1484
    %1486 = vdwg.mxu0
    %1487 = vmatprep.subr.bf16.mxu0 %v950
    %1488 = vmatpush1.bf16.msra.mxu0 %v949
    %1489 = vmatprep.subr.bf16.mxu0 %v946
    %1490 = vmatpush1.bf16.msra.mxu0 %v945
    %1491 = vmatprep.subr.bf16.mxu0 %v942
    %1492 = vmatpush1.bf16.msra.mxu0 %v941
    %1493 = vmatprep.subr.bf16.mxu0 %v938
    %1494 = vmatpush1.bf16.msra.mxu0 %v937
    %1495 = vmatprep.subr.bf16.mxu0 %v934
    %1496 = vmatpush1.bf16.msra.mxu0 %v933
    %1497 = vmatprep.subr.bf16.mxu0 %v930
    %1498 = vmatpush1.bf16.msra.mxu0 %v929
    %1499 = vmatprep.subr.bf16.mxu0 %v926
    %1500 = vmatpush1.bf16.msra.mxu0 %v925
    %1501 = vmatprep.subr.bf16.mxu0 %v922
    %1502 = vmatpush1.bf16.msra.mxu0 %v921
    %1503 = vmatprep.subr.bf16.mxu0 %v982
    %1504 = vmatpush2.bf16.msra.mxu0 %v981
    %1505 = vmatprep.subr.bf16.mxu0 %v978
    %1506 = vmatpush2.bf16.msra.mxu0 %v977
    %1507 = vmatprep.subr.bf16.mxu0 %v974
    %1508 = vmatpush2.bf16.msra.mxu0 %v973
    %1509 = vmatprep.subr.bf16.mxu0 %v970
    %1510 = vmatpush2.bf16.msra.mxu0 %v969
    %1511 = vmatprep.subr.bf16.mxu0 %v966
    %1512 = vmatpush2.bf16.msra.mxu0 %v965
    %1513 = vmatprep.subr.bf16.mxu0 %v962
    %1514 = vmatpush2.bf16.msra.mxu0 %v961
    %1515 = vmatprep.subr.bf16.mxu0 %v958
    %1516 = vmatpush2.bf16.msra.mxu0 %v957
    %1517 = vmatprep.subr.bf16.mxu0 %v954
    %1518 = vmatpush2.bf16.msra.mxu0 %v953
    %1519 = vmatprep.mubr.bf16.mxu0 %v107
    %1520 = vmatmul.mubr.bf16.gmra.mxu0 %v106
    %v1521 = vpop.f32.mrf.mxu0
    %v1522 = vadd.f32 %v322, %v1521
    %v1523 = vpop.f32.mrf.mxu0
    %v1524 = vadd.f32 %v326, %v1523
    %v1525 = vpop.f32.mrf.mxu0
    %v1526 = vadd.f32 %v322, %v1525
    %v1527 = vpop.f32.mrf.mxu0
    %v1528 = vadd.f32 %v326, %v1527
    %1529 = vdwg.mxu0
    %1530 = vmatprep.subr.bf16.mxu0 %v1014
    %1531 = vmatpush1.bf16.msra.mxu0 %v1013
    %1532 = vmatprep.subr.bf16.mxu0 %v1010
    %1533 = vmatpush1.bf16.msra.mxu0 %v1009
    %1534 = vmatprep.subr.bf16.mxu0 %v1006
    %1535 = vmatpush1.bf16.msra.mxu0 %v1005
    %1536 = vmatprep.subr.bf16.mxu0 %v1002
    %1537 = vmatpush1.bf16.msra.mxu0 %v1001
    %1538 = vmatprep.subr.bf16.mxu0 %v998
    %1539 = vmatpush1.bf16.msra.mxu0 %v997
    %1540 = vmatprep.subr.bf16.mxu0 %v994
    %1541 = vmatpush1.bf16.msra.mxu0 %v993
    %1542 = vmatprep.subr.bf16.mxu0 %v990
    %1543 = vmatpush1.bf16.msra.mxu0 %v989
    %1544 = vmatprep.subr.bf16.mxu0 %v986
    %1545 = vmatpush1.bf16.msra.mxu0 %v985
    %1546 = vmatprep.subr.bf16.mxu0 %v1046
    %1547 = vmatpush2.bf16.msra.mxu0 %v1045
    %1548 = vmatprep.subr.bf16.mxu0 %v1042
    %1549 = vmatpush2.bf16.msra.mxu0 %v1041
    %1550 = vmatprep.subr.bf16.mxu0 %v1038
    %1551 = vmatpush2.bf16.msra.mxu0 %v1037
    %1552 = vmatprep.subr.bf16.mxu0 %v1034
    %1553 = vmatpush2.bf16.msra.mxu0 %v1033
    %1554 = vmatprep.subr.bf16.mxu0 %v1030
    %1555 = vmatpush2.bf16.msra.mxu0 %v1029
    %1556 = vmatprep.subr.bf16.mxu0 %v1026
    %1557 = vmatpush2.bf16.msra.mxu0 %v1025
    %1558 = vmatprep.subr.bf16.mxu0 %v1022
    %1559 = vmatpush2.bf16.msra.mxu0 %v1021
    %1560 = vmatprep.subr.bf16.mxu0 %v1018
    %1561 = vmatpush2.bf16.msra.mxu0 %v1017
    %1562 = vmatprep.mubr.bf16.mxu0 %v109
    %1563 = vmatmul.mubr.bf16.gmra.mxu0 %v108
    %v1564 = vpop.f32.mrf.mxu0
    %v1565 = vadd.f32 %v1522, %v1564
    %v1566 = vpop.f32.mrf.mxu0
    %v1567 = vadd.f32 %v1524, %v1566
    %v1568 = vpop.f32.mrf.mxu0
    %v1569 = vadd.f32 %v1526, %v1568
    %v1570 = vpop.f32.mrf.mxu0
    %v1571 = vadd.f32 %v1528, %v1570
    %1572 = vdwg.mxu0
    %1573 = vmatprep.subr.bf16.mxu0 %v1078
    %1574 = vmatpush1.bf16.msra.mxu0 %v1077
    %1575 = vmatprep.subr.bf16.mxu0 %v1074
    %1576 = vmatpush1.bf16.msra.mxu0 %v1073
    %1577 = vmatprep.subr.bf16.mxu0 %v1070
    %1578 = vmatpush1.bf16.msra.mxu0 %v1069
    %1579 = vmatprep.subr.bf16.mxu0 %v1066
    %1580 = vmatpush1.bf16.msra.mxu0 %v1065
    %1581 = vmatprep.subr.bf16.mxu0 %v1062
    %1582 = vmatpush1.bf16.msra.mxu0 %v1061
    %1583 = vmatprep.subr.bf16.mxu0 %v1058
    %1584 = vmatpush1.bf16.msra.mxu0 %v1057
    %1585 = vmatprep.subr.bf16.mxu0 %v1054
    %1586 = vmatpush1.bf16.msra.mxu0 %v1053
    %1587 = vmatprep.subr.bf16.mxu0 %v1050
    %1588 = vmatpush1.bf16.msra.mxu0 %v1049
    %1589 = vmatprep.subr.bf16.mxu0 %v1110
    %1590 = vmatpush2.bf16.msra.mxu0 %v1109
    %1591 = vmatprep.subr.bf16.mxu0 %v1106
    %1592 = vmatpush2.bf16.msra.mxu0 %v1105
    %1593 = vmatprep.subr.bf16.mxu0 %v1102
    %1594 = vmatpush2.bf16.msra.mxu0 %v1101
    %1595 = vmatprep.subr.bf16.mxu0 %v1098
    %1596 = vmatpush2.bf16.msra.mxu0 %v1097
    %1597 = vmatprep.subr.bf16.mxu0 %v1094
    %1598 = vmatpush2.bf16.msra.mxu0 %v1093
    %1599 = vmatprep.subr.bf16.mxu0 %v1090
    %1600 = vmatpush2.bf16.msra.mxu0 %v1089
    %1601 = vmatprep.subr.bf16.mxu0 %v1086
    %1602 = vmatpush2.bf16.msra.mxu0 %v1085
    %1603 = vmatprep.subr.bf16.mxu0 %v1082
    %1604 = vmatpush2.bf16.msra.mxu0 %v1081
    %1605 = vmatprep.mubr.bf16.mxu0 %v111
    %1606 = vmatmul.mubr.bf16.gmra.mxu0 %v110
    %v1607 = vpop.f32.mrf.mxu0
    %v1608 = vadd.f32 %v1565, %v1607
    %v1609 = vpop.f32.mrf.mxu0
    %v1610 = vadd.f32 %v1567, %v1609
    %v1611 = vpop.f32.mrf.mxu0
    %v1612 = vadd.f32 %v1569, %v1611
    %v1613 = vpop.f32.mrf.mxu0
    %v1614 = vadd.f32 %v1571, %v1613
    %1615 = vdwg.mxu0
    %1616 = vmatprep.subr.bf16.mxu0 0
    %1617 = vmatpush1.bf16.msra.mxu0 0
    %1618 = vmatprep.subr.bf16.mxu0 0
    %1619 = vmatpush1.bf16.msra.mxu0 0
    %1620 = vmatprep.subr.bf16.mxu0 0
    %1621 = vmatpush1.bf16.msra.mxu0 0
    %1622 = vmatprep.subr.bf16.mxu0 0
    %1623 = vmatpush1.bf16.msra.mxu0 0
    %1624 = vmatprep.subr.bf16.mxu0 0
    %1625 = vmatpush1.bf16.msra.mxu0 0
    %1626 = vmatprep.subr.bf16.mxu0 0
    %1627 = vmatpush1.bf16.msra.mxu0 0
    %1628 = vmatprep.subr.bf16.mxu0 0
    %1629 = vmatpush1.bf16.msra.mxu0 0
    %1630 = vmatprep.subr.bf16.mxu0 %v1114
    %1631 = vmatpush1.bf16.msra.mxu0 %v1113
    %1632 = vmatprep.subr.bf16.mxu0 0
    %1633 = vmatpush2.bf16.msra.mxu0 0
    %1634 = vmatprep.subr.bf16.mxu0 0
    %1635 = vmatpush2.bf16.msra.mxu0 0
    %1636 = vmatprep.subr.bf16.mxu0 0
    %1637 = vmatpush2.bf16.msra.mxu0 0
    %1638 = vmatprep.subr.bf16.mxu0 0
    %1639 = vmatpush2.bf16.msra.mxu0 0
    %1640 = vmatprep.subr.bf16.mxu0 0
    %1641 = vmatpush2.bf16.msra.mxu0 0
    %1642 = vmatprep.subr.bf16.mxu0 0
    %1643 = vmatpush2.bf16.msra.mxu0 0
    %1644 = vmatprep.subr.bf16.mxu0 0
    %1645 = vmatpush2.bf16.msra.mxu0 0
    %1646 = vmatprep.subr.bf16.mxu0 0
    %1647 = vmatpush2.bf16.msra.mxu0 0
    %1648 = vmatprep.mubr.bf16.mxu0 0
    %1649 = vmatmul.mubr.bf16.gmra.mxu0 %v1313
    %v1650 = vpop.f32.mrf.mxu0
    %v1651 = vadd.f32 %v1608, %v1650
    %v1652 = vpop.f32.mrf.mxu0
    %v1653 = vadd.f32 %v1610, %v1652
    %v1654 = vpop.f32.mrf.mxu0
    %v1655 = vadd.f32 %v1612, %v1654
    %v1656 = vpop.f32.mrf.mxu0
    %v1657 = vadd.f32 %v1614, %v1656
    %1658 = vdwg.mxu0
    %v1659 = vmax.f32 %v1479, 0.0
    %v1660 = vmax.f32 %v1481, 0.0
    %v1661 = vmax.f32 %v1651, 0.0
    %v1662 = vmax.f32 %v1653, 0.0
    %v1663 = vmax.f32 %v1483, 0.0
    %v1664 = vmax.f32 %v1485, 0.0
    %v1665 = vmax.f32 %v1655, 0.0
    %v1666 = vmax.f32 %v1657, 0.0
    %v1667 = vpack.c.bf16 %v1663, %v1659
    %v1668 = vpack.c.bf16 %v1664, %v1660
    %v1669 = vpack.c.bf16 %v1665, %v1661
    %v1670 = vpack.c.bf16 %v1666, %v1662
    %v1671 = vld [vmem:[%s3] sm:$0xff]
    %v1672 = vld [vmem:[%s3 + $0x8] sm:$0xff]
    %v1673 = vld [vmem:[%s3 + $0x10] sm:$0xff]
    %v1674 = vld [vmem:[%s3 + $0x18] sm:$0xff]
    %v1675 = vld [vmem:[%s3 + $0x20] sm:$0xff]
    %v1676 = vld [vmem:[%s3 + $0x28] sm:$0xff]
    %v1677 = vld [vmem:[%s3 + $0x30] sm:$0xff]
    %v1678 = vld [vmem:[%s3 + $0x38] sm:$0xff]
    %v1679 = vld [vmem:[%s3 + $0x40] sm:$0xff]
    %v1680 = vld [vmem:[%s3 + $0x48] sm:$0xff]
    %v1681 = vld [vmem:[%s3 + $0x50] sm:$0xff]
    %v1682 = vld [vmem:[%s3 + $0x58] sm:$0xff]
    %v1683 = vld [vmem:[%s3 + $0x60] sm:$0xff]
    %v1684 = vld [vmem:[%s3 + $0x68] sm:$0xff]
    %v1685 = vld [vmem:[%s3 + $0x70] sm:$0xff]
    %v1686 = vld [vmem:[%s3 + $0x78] sm:$0xff]
    %v1687 = vld [vmem:[%s3 + $0x80] sm:$0xff]
    %v1688 = vld [vmem:[%s3 + $0x88] sm:$0xff]
    %v1689 = vld [vmem:[%s3 + $0x90] sm:$0xff]
    %v1690 = vld [vmem:[%s3 + $0x98] sm:$0xff]
    %v1691 = vld [vmem:[%s3 + $0xa0] sm:$0xff]
    %v1692 = vld [vmem:[%s3 + $0xa8] sm:$0xff]
    %v1693 = vld [vmem:[%s3 + $0xb0] sm:$0xff]
    %v1694 = vld [vmem:[%s3 + $0xb8] sm:$0xff]
    %v1695 = vld [vmem:[%s3 + $0xc0] sm:$0xff]
    %v1696 = vld [vmem:[%s3 + $0xc8] sm:$0xff]
    %v1697 = vld [vmem:[%s3 + $0xd0] sm:$0xff]
    %v1698 = vld [vmem:[%s3 + $0xd8] sm:$0xff]
    %v1699 = vld [vmem:[%s3 + $0xe0] sm:$0xff]
    %v1700 = vld [vmem:[%s3 + $0xe8] sm:$0xff]
    %v1701 = vld [vmem:[%s3 + $0xf0] sm:$0xff]
    %v1702 = vld [vmem:[%s3 + $0xf8] sm:$0xff]
    %v1703 = vld [vmem:[%s3 + $0x100] sm:$0xff]
    %v1704 = vld [vmem:[%s3 + $0x108] sm:$0xff]
    %v1705 = vld [vmem:[%s3 + $0x110] sm:$0xff]
    %v1706 = vld [vmem:[%s3 + $0x118] sm:$0xff]
    %v1707 = vld [vmem:[%s3 + $0x120] sm:$0xff]
    %v1708 = vld [vmem:[%s3 + $0x128] sm:$0xff]
    %v1709 = vld [vmem:[%s3 + $0x130] sm:$0xff]
    %v1710 = vld [vmem:[%s3 + $0x138] sm:$0xff]
    %v1711 = vld [vmem:[%s3 + $0x140] sm:$0xff]
    %v1712 = vld [vmem:[%s3 + $0x148] sm:$0xff]
    %v1713 = vld [vmem:[%s3 + $0x150] sm:$0xff]
    %v1714 = vld [vmem:[%s3 + $0x158] sm:$0xff]
    %v1715 = vld [vmem:[%s3 + $0x160] sm:$0xff]
    %v1716 = vld [vmem:[%s3 + $0x168] sm:$0xff]
    %v1717 = vld [vmem:[%s3 + $0x170] sm:$0xff]
    %v1718 = vld [vmem:[%s3 + $0x178] sm:$0xff]
    %v1719 = vld [vmem:[%s3 + $0x180] sm:$0xff]
    %v1720 = vld [vmem:[%s3 + $0x188] sm:$0xff]
    %v1721 = vld [vmem:[%s3 + $0x190] sm:$0xff]
    %v1722 = vld [vmem:[%s3 + $0x198] sm:$0xff]
    %v1723 = vld [vmem:[%s3 + $0x1a0] sm:$0xff]
    %v1724 = vld [vmem:[%s3 + $0x1a8] sm:$0xff]
    %v1725 = vld [vmem:[%s3 + $0x1b0] sm:$0xff]
    %v1726 = vld [vmem:[%s3 + $0x1b8] sm:$0xff]
    %v1727 = vld [vmem:[%s3 + $0x1c0] sm:$0xff]
    %v1728 = vld [vmem:[%s3 + $0x1c8] sm:$0xff]
    %v1729 = vld [vmem:[%s3 + $0x1d0] sm:$0xff]
    %v1730 = vld [vmem:[%s3 + $0x1d8] sm:$0xff]
    %v1731 = vld [vmem:[%s3 + $0x1e0] sm:$0xff]
    %v1732 = vld [vmem:[%s3 + $0x1e8] sm:$0xff]
    %v1733 = vld [vmem:[%s3 + $0x1f0] sm:$0xff]
    %v1734 = vld [vmem:[%s3 + $0x1f8] sm:$0xff]
    %v1735 = vld [vmem:[%s4] sm:$0x3]
    %v1737 = vlaneseq
    %v1738 = vshrl.u32 %v1737, 7
    %v1739 = vsub.s32 0, %v1738
    %v1740 = vrot.slane %v1735, %v1739
    %v1741 = vlaneseq
    %v1742 = vshrl.u32 %v1741, 7
    %v1743 = vsub.s32 1, %v1742
    %v1744 = vrot.slane %v1735, %v1743
    %v1811 = vunpack.c.l.b16 %v1671
    %v1812 = vunpack.c.h.b16 %v1671
    %v1813 = vunpack.c.l.b16 %v1672
    %v1814 = vunpack.c.h.b16 %v1672
    %v1815 = vunpack.c.l.b16 %v1673
    %v1816 = vunpack.c.h.b16 %v1673
    %v1817 = vunpack.c.l.b16 %v1674
    %v1818 = vunpack.c.h.b16 %v1674
    %v1819 = vunpack.c.l.b16 %v1675
    %v1820 = vunpack.c.h.b16 %v1675
    %v1821 = vunpack.c.l.b16 %v1676
    %v1822 = vunpack.c.h.b16 %v1676
    %v1823 = vunpack.c.l.b16 %v1677
    %v1824 = vunpack.c.h.b16 %v1677
    %v1825 = vunpack.c.l.b16 %v1678
    %v1826 = vunpack.c.h.b16 %v1678
    %v1827 = vunpack.c.l.b16 %v1679
    %v1828 = vunpack.c.h.b16 %v1679
    %v1829 = vunpack.c.l.b16 %v1680
    %v1830 = vunpack.c.h.b16 %v1680
    %v1831 = vunpack.c.l.b16 %v1681
    %v1832 = vunpack.c.h.b16 %v1681
    %v1833 = vunpack.c.l.b16 %v1682
    %v1834 = vunpack.c.h.b16 %v1682
    %v1835 = vunpack.c.l.b16 %v1683
    %v1836 = vunpack.c.h.b16 %v1683
    %v1837 = vunpack.c.l.b16 %v1684
    %v1838 = vunpack.c.h.b16 %v1684
    %v1839 = vunpack.c.l.b16 %v1685
    %v1840 = vunpack.c.h.b16 %v1685
    %v1841 = vunpack.c.l.b16 %v1686
    %v1842 = vunpack.c.h.b16 %v1686
    %v1843 = vunpack.c.l.b16 %v1687
    %v1844 = vunpack.c.h.b16 %v1687
    %v1845 = vunpack.c.l.b16 %v1688
    %v1846 = vunpack.c.h.b16 %v1688
    %v1847 = vunpack.c.l.b16 %v1689
    %v1848 = vunpack.c.h.b16 %v1689
    %v1849 = vunpack.c.l.b16 %v1690
    %v1850 = vunpack.c.h.b16 %v1690
    %v1851 = vunpack.c.l.b16 %v1691
    %v1852 = vunpack.c.h.b16 %v1691
    %v1853 = vunpack.c.l.b16 %v1692
    %v1854 = vunpack.c.h.b16 %v1692
    %v1855 = vunpack.c.l.b16 %v1693
    %v1856 = vunpack.c.h.b16 %v1693
    %v1857 = vunpack.c.l.b16 %v1694
    %v1858 = vunpack.c.h.b16 %v1694
    %v1859 = vunpack.c.l.b16 %v1695
    %v1860 = vunpack.c.h.b16 %v1695
    %v1861 = vunpack.c.l.b16 %v1696
    %v1862 = vunpack.c.h.b16 %v1696
    %v1863 = vunpack.c.l.b16 %v1697
    %v1864 = vunpack.c.h.b16 %v1697
    %v1865 = vunpack.c.l.b16 %v1698
    %v1866 = vunpack.c.h.b16 %v1698
    %v1867 = vunpack.c.l.b16 %v1699
    %v1868 = vunpack.c.h.b16 %v1699
    %v1869 = vunpack.c.l.b16 %v1700
    %v1870 = vunpack.c.h.b16 %v1700
    %v1871 = vunpack.c.l.b16 %v1701
    %v1872 = vunpack.c.h.b16 %v1701
    %v1873 = vunpack.c.l.b16 %v1702
    %v1874 = vunpack.c.h.b16 %v1702
    %v1875 = vunpack.c.l.b16 %v1703
    %v1876 = vunpack.c.h.b16 %v1703
    %v1877 = vunpack.c.l.b16 %v1704
    %v1878 = vunpack.c.h.b16 %v1704
    %v1879 = vunpack.c.l.b16 %v1705
    %v1880 = vunpack.c.h.b16 %v1705
    %v1881 = vunpack.c.l.b16 %v1706
    %v1882 = vunpack.c.h.b16 %v1706
    %v1883 = vunpack.c.l.b16 %v1707
    %v1884 = vunpack.c.h.b16 %v1707
    %v1885 = vunpack.c.l.b16 %v1708
    %v1886 = vunpack.c.h.b16 %v1708
    %v1887 = vunpack.c.l.b16 %v1709
    %v1888 = vunpack.c.h.b16 %v1709
    %v1889 = vunpack.c.l.b16 %v1710
    %v1890 = vunpack.c.h.b16 %v1710
    %v1891 = vunpack.c.l.b16 %v1711
    %v1892 = vunpack.c.h.b16 %v1711
    %v1893 = vunpack.c.l.b16 %v1712
    %v1894 = vunpack.c.h.b16 %v1712
    %v1895 = vunpack.c.l.b16 %v1713
    %v1896 = vunpack.c.h.b16 %v1713
    %v1897 = vunpack.c.l.b16 %v1714
    %v1898 = vunpack.c.h.b16 %v1714
    %v1899 = vunpack.c.l.b16 %v1715
    %v1900 = vunpack.c.h.b16 %v1715
    %v1901 = vunpack.c.l.b16 %v1716
    %v1902 = vunpack.c.h.b16 %v1716
    %v1903 = vunpack.c.l.b16 %v1717
    %v1904 = vunpack.c.h.b16 %v1717
    %v1905 = vunpack.c.l.b16 %v1718
    %v1906 = vunpack.c.h.b16 %v1718
    %v1907 = vunpack.c.l.b16 %v1719
    %v1908 = vunpack.c.h.b16 %v1719
    %v1909 = vunpack.c.l.b16 %v1720
    %v1910 = vunpack.c.h.b16 %v1720
    %v1911 = vunpack.c.l.b16 %v1721
    %v1912 = vunpack.c.h.b16 %v1721
    %v1913 = vunpack.c.l.b16 %v1722
    %v1914 = vunpack.c.h.b16 %v1722
    %v1915 = vunpack.c.l.b16 %v1723
    %v1916 = vunpack.c.h.b16 %v1723
    %v1917 = vunpack.c.l.b16 %v1724
    %v1918 = vunpack.c.h.b16 %v1724
    %v1919 = vunpack.c.l.b16 %v1725
    %v1920 = vunpack.c.h.b16 %v1725
    %v1921 = vunpack.c.l.b16 %v1726
    %v1922 = vunpack.c.h.b16 %v1726
    %v1923 = vunpack.c.l.b16 %v1727
    %v1924 = vunpack.c.h.b16 %v1727
    %v1925 = vunpack.c.l.b16 %v1728
    %v1926 = vunpack.c.h.b16 %v1728
    %v1927 = vunpack.c.l.b16 %v1729
    %v1928 = vunpack.c.h.b16 %v1729
    %v1929 = vunpack.c.l.b16 %v1730
    %v1930 = vunpack.c.h.b16 %v1730
    %v1931 = vunpack.c.l.b16 %v1731
    %v1932 = vunpack.c.h.b16 %v1731
    %v1933 = vunpack.c.l.b16 %v1732
    %v1934 = vunpack.c.h.b16 %v1732
    %v1935 = vunpack.c.l.b16 %v1733
    %v1936 = vunpack.c.h.b16 %v1733
    %v1937 = vunpack.c.l.b16 %v1734
    %v1938 = vunpack.c.h.b16 %v1734
    %v1939 = vpack.c.b16 %v1813, %v1811
    %v1940 = vpack.c.b16 %v1814, %v1812
    %v1941 = vpack.c.b16 %v1817, %v1815
    %v1942 = vpack.c.b16 %v1818, %v1816
    %v1943 = vpack.c.b16 %v1821, %v1819
    %v1944 = vpack.c.b16 %v1822, %v1820
    %v1945 = vpack.c.b16 %v1825, %v1823
    %v1946 = vpack.c.b16 %v1826, %v1824
    %v1947 = vpack.c.b16 %v1829, %v1827
    %v1948 = vpack.c.b16 %v1830, %v1828
    %v1949 = vpack.c.b16 %v1833, %v1831
    %v1950 = vpack.c.b16 %v1834, %v1832
    %v1951 = vpack.c.b16 %v1837, %v1835
    %v1952 = vpack.c.b16 %v1838, %v1836
    %v1953 = vpack.c.b16 %v1841, %v1839
    %v1954 = vpack.c.b16 %v1842, %v1840
    %v1955 = vpack.c.b16 %v1845, %v1843
    %v1956 = vpack.c.b16 %v1846, %v1844
    %v1957 = vpack.c.b16 %v1849, %v1847
    %v1958 = vpack.c.b16 %v1850, %v1848
    %v1959 = vpack.c.b16 %v1853, %v1851
    %v1960 = vpack.c.b16 %v1854, %v1852
    %v1961 = vpack.c.b16 %v1857, %v1855
    %v1962 = vpack.c.b16 %v1858, %v1856
    %v1963 = vpack.c.b16 %v1861, %v1859
    %v1964 = vpack.c.b16 %v1862, %v1860
    %v1965 = vpack.c.b16 %v1865, %v1863
    %v1966 = vpack.c.b16 %v1866, %v1864
    %v1967 = vpack.c.b16 %v1869, %v1867
    %v1968 = vpack.c.b16 %v1870, %v1868
    %v1969 = vpack.c.b16 %v1873, %v1871
    %v1970 = vpack.c.b16 %v1874, %v1872
    %v1971 = vpack.c.b16 %v1877, %v1875
    %v1972 = vpack.c.b16 %v1878, %v1876
    %v1973 = vpack.c.b16 %v1881, %v1879
    %v1974 = vpack.c.b16 %v1882, %v1880
    %v1975 = vpack.c.b16 %v1885, %v1883
    %v1976 = vpack.c.b16 %v1886, %v1884
    %v1977 = vpack.c.b16 %v1889, %v1887
    %v1978 = vpack.c.b16 %v1890, %v1888
    %v1979 = vpack.c.b16 %v1893, %v1891
    %v1980 = vpack.c.b16 %v1894, %v1892
    %v1981 = vpack.c.b16 %v1897, %v1895
    %v1982 = vpack.c.b16 %v1898, %v1896
    %v1983 = vpack.c.b16 %v1901, %v1899
    %v1984 = vpack.c.b16 %v1902, %v1900
    %v1985 = vpack.c.b16 %v1905, %v1903
    %v1986 = vpack.c.b16 %v1906, %v1904
    %v1987 = vpack.c.b16 %v1909, %v1907
    %v1988 = vpack.c.b16 %v1910, %v1908
    %v1989 = vpack.c.b16 %v1913, %v1911
    %v1990 = vpack.c.b16 %v1914, %v1912
    %v1991 = vpack.c.b16 %v1917, %v1915
    %v1992 = vpack.c.b16 %v1918, %v1916
    %v1993 = vpack.c.b16 %v1921, %v1919
    %v1994 = vpack.c.b16 %v1922, %v1920
    %v1995 = vpack.c.b16 %v1925, %v1923
    %v1996 = vpack.c.b16 %v1926, %v1924
    %v1997 = vpack.c.b16 %v1929, %v1927
    %v1998 = vpack.c.b16 %v1930, %v1928
    %v1999 = vpack.c.b16 %v1933, %v1931
    %v2000 = vpack.c.b16 %v1934, %v1932
    %v2001 = vpack.c.b16 %v1937, %v1935
    %v2002 = vpack.c.b16 %v1938, %v1936
    %2067 = vmatprep.subr.bf16.mxu0 %v1954
    %2068 = vmatpush1.bf16.msra.mxu0 %v1953
    %2069 = vmatprep.subr.bf16.mxu0 %v1952
    %2070 = vmatpush1.bf16.msra.mxu0 %v1951
    %2071 = vmatprep.subr.bf16.mxu0 %v1950
    %2072 = vmatpush1.bf16.msra.mxu0 %v1949
    %2073 = vmatprep.subr.bf16.mxu0 %v1948
    %2074 = vmatpush1.bf16.msra.mxu0 %v1947
    %2075 = vmatprep.subr.bf16.mxu0 %v1946
    %2076 = vmatpush1.bf16.msra.mxu0 %v1945
    %2077 = vmatprep.subr.bf16.mxu0 %v1944
    %2078 = vmatpush1.bf16.msra.mxu0 %v1943
    %2079 = vmatprep.subr.bf16.mxu0 %v1942
    %2080 = vmatpush1.bf16.msra.mxu0 %v1941
    %2081 = vmatprep.subr.bf16.mxu0 %v1940
    %2082 = vmatpush1.bf16.msra.mxu0 %v1939
    %2083 = vmatprep.subr.bf16.mxu0 %v1970
    %2084 = vmatpush2.bf16.msra.mxu0 %v1969
    %2085 = vmatprep.subr.bf16.mxu0 %v1968
    %2086 = vmatpush2.bf16.msra.mxu0 %v1967
    %2087 = vmatprep.subr.bf16.mxu0 %v1966
    %2088 = vmatpush2.bf16.msra.mxu0 %v1965
    %2089 = vmatprep.subr.bf16.mxu0 %v1964
    %2090 = vmatpush2.bf16.msra.mxu0 %v1963
    %2091 = vmatprep.subr.bf16.mxu0 %v1962
    %2092 = vmatpush2.bf16.msra.mxu0 %v1961
    %2093 = vmatprep.subr.bf16.mxu0 %v1960
    %2094 = vmatpush2.bf16.msra.mxu0 %v1959
    %2095 = vmatprep.subr.bf16.mxu0 %v1958
    %2096 = vmatpush2.bf16.msra.mxu0 %v1957
    %2097 = vmatprep.subr.bf16.mxu0 %v1956
    %2098 = vmatpush2.bf16.msra.mxu0 %v1955
    %2099 = vmatprep.mubr.bf16.mxu0 %v1668
    %2100 = vmatmul.mubr.bf16.gmra.mxu0 %v1667
    %v2101 = vpop.f32.mrf.mxu0
    %v2102 = vadd.f32 %v1740, %v2101
    %v2103 = vpop.f32.mrf.mxu0
    %v2104 = vadd.f32 %v1744, %v2103
    %v2105 = vpop.f32.mrf.mxu0
    %v2106 = vadd.f32 %v1740, %v2105
    %v2107 = vpop.f32.mrf.mxu0
    %v2108 = vadd.f32 %v1744, %v2107
    %2109 = vdwg.mxu0
    %2110 = vmatprep.subr.bf16.mxu0 %v1986
    %2111 = vmatpush1.bf16.msra.mxu0 %v1985
    %2112 = vmatprep.subr.bf16.mxu0 %v1984
    %2113 = vmatpush1.bf16.msra.mxu0 %v1983
    %2114 = vmatprep.subr.bf16.mxu0 %v1982
    %2115 = vmatpush1.bf16.msra.mxu0 %v1981
    %2116 = vmatprep.subr.bf16.mxu0 %v1980
    %2117 = vmatpush1.bf16.msra.mxu0 %v1979
    %2118 = vmatprep.subr.bf16.mxu0 %v1978
    %2119 = vmatpush1.bf16.msra.mxu0 %v1977
    %2120 = vmatprep.subr.bf16.mxu0 %v1976
    %2121 = vmatpush1.bf16.msra.mxu0 %v1975
    %2122 = vmatprep.subr.bf16.mxu0 %v1974
    %2123 = vmatpush1.bf16.msra.mxu0 %v1973
    %2124 = vmatprep.subr.bf16.mxu0 %v1972
    %2125 = vmatpush1.bf16.msra.mxu0 %v1971
    %2126 = vmatprep.subr.bf16.mxu0 %v2002
    %2127 = vmatpush2.bf16.msra.mxu0 %v2001
    %2128 = vmatprep.subr.bf16.mxu0 %v2000
    %2129 = vmatpush2.bf16.msra.mxu0 %v1999
    %2130 = vmatprep.subr.bf16.mxu0 %v1998
    %2131 = vmatpush2.bf16.msra.mxu0 %v1997
    %2132 = vmatprep.subr.bf16.mxu0 %v1996
    %2133 = vmatpush2.bf16.msra.mxu0 %v1995
    %2134 = vmatprep.subr.bf16.mxu0 %v1994
    %2135 = vmatpush2.bf16.msra.mxu0 %v1993
    %2136 = vmatprep.subr.bf16.mxu0 %v1992
    %2137 = vmatpush2.bf16.msra.mxu0 %v1991
    %2138 = vmatprep.subr.bf16.mxu0 %v1990
    %2139 = vmatpush2.bf16.msra.mxu0 %v1989
    %2140 = vmatprep.subr.bf16.mxu0 %v1988
    %2141 = vmatpush2.bf16.msra.mxu0 %v1987
    %2142 = vmatprep.mubr.bf16.mxu0 %v1670
    %2143 = vmatmul.mubr.bf16.gmra.mxu0 %v1669
    %v2144 = vpop.f32.mrf.mxu0
    %v2145 = vadd.f32 %v2102, %v2144
    %v2146 = vpop.f32.mrf.mxu0
    %v2147 = vadd.f32 %v2104, %v2146
    %v2148 = vpop.f32.mrf.mxu0
    %v2149 = vadd.f32 %v2106, %v2148
    %v2150 = vpop.f32.mrf.mxu0
    %v2151 = vadd.f32 %v2108, %v2150
    %2152 = vdwg.mxu0
    %v2153 = vmax.f32 %v2145, 0.0
    %v2154 = vmax.f32 %v2147, 0.0
    %v2155 = vmax.f32 %v2149, 0.0
    %v2156 = vmax.f32 %v2151, 0.0
    %v2157 = vpack.c.bf16 %v2155, %v2153
    %v2158 = vpack.c.bf16 %v2156, %v2154
    %v2159 = vld [vmem:[%s5] sm:$0xf]
    %v2160 = vld [vmem:[%s5 + $0x4] sm:$0xf]
    %v2161 = vld [vmem:[%s5 + $0x8] sm:$0xf]
    %v2162 = vld [vmem:[%s5 + $0xc] sm:$0xf]
    %v2163 = vld [vmem:[%s5 + $0x10] sm:$0xf]
    %v2164 = vld [vmem:[%s5 + $0x14] sm:$0xf]
    %v2165 = vld [vmem:[%s5 + $0x18] sm:$0xf]
    %v2166 = vld [vmem:[%s5 + $0x1c] sm:$0xf]
    %v2167 = vld [vmem:[%s5 + $0x20] sm:$0xf]
    %v2168 = vld [vmem:[%s5 + $0x24] sm:$0xf]
    %v2169 = vld [vmem:[%s5 + $0x28] sm:$0xf]
    %v2170 = vld [vmem:[%s5 + $0x2c] sm:$0xf]
    %v2171 = vld [vmem:[%s5 + $0x30] sm:$0xf]
    %v2172 = vld [vmem:[%s5 + $0x34] sm:$0xf]
    %v2173 = vld [vmem:[%s5 + $0x38] sm:$0xf]
    %v2174 = vld [vmem:[%s5 + $0x3c] sm:$0xf]
    %v2175 = vld [vmem:[%s5 + $0x40] sm:$0xf]
    %v2176 = vld [vmem:[%s5 + $0x44] sm:$0xf]
    %v2177 = vld [vmem:[%s5 + $0x48] sm:$0xf]
    %v2178 = vld [vmem:[%s5 + $0x4c] sm:$0xf]
    %v2179 = vld [vmem:[%s5 + $0x50] sm:$0xf]
    %v2180 = vld [vmem:[%s5 + $0x54] sm:$0xf]
    %v2181 = vld [vmem:[%s5 + $0x58] sm:$0xf]
    %v2182 = vld [vmem:[%s5 + $0x5c] sm:$0xf]
    %v2183 = vld [vmem:[%s5 + $0x60] sm:$0xf]
    %v2184 = vld [vmem:[%s5 + $0x64] sm:$0xf]
    %v2185 = vld [vmem:[%s5 + $0x68] sm:$0xf]
    %v2186 = vld [vmem:[%s5 + $0x6c] sm:$0xf]
    %v2187 = vld [vmem:[%s5 + $0x70] sm:$0xf]
    %v2188 = vld [vmem:[%s5 + $0x74] sm:$0xf]
    %v2189 = vld [vmem:[%s5 + $0x78] sm:$0xf]
    %v2190 = vld [vmem:[%s5 + $0x7c] sm:$0xf]
    %v2191 = vld [vmem:[%s6] sm:$0x1]
    %v2193 = vlaneseq
    %v2194 = vshrl.u32 %v2193, 7
    %v2195 = vsub.s32 0, %v2194
    %v2196 = vrot.slane %v2191, %v2195
    %v2230 = vunpack.c.l.b16 %v2159
    %v2231 = vunpack.c.l.b16 %v2160
    %v2232 = vunpack.c.l.b16 %v2161
    %v2233 = vunpack.c.l.b16 %v2162
    %v2234 = vunpack.c.l.b16 %v2163
    %v2235 = vunpack.c.l.b16 %v2164
    %v2236 = vunpack.c.l.b16 %v2165
    %v2237 = vunpack.c.l.b16 %v2166
    %v2238 = vunpack.c.l.b16 %v2167
    %v2239 = vunpack.c.l.b16 %v2168
    %v2240 = vunpack.c.l.b16 %v2169
    %v2241 = vunpack.c.l.b16 %v2170
    %v2242 = vunpack.c.l.b16 %v2171
    %v2243 = vunpack.c.l.b16 %v2172
    %v2244 = vunpack.c.l.b16 %v2173
    %v2245 = vunpack.c.l.b16 %v2174
    %v2246 = vunpack.c.l.b16 %v2175
    %v2247 = vunpack.c.l.b16 %v2176
    %v2248 = vunpack.c.l.b16 %v2177
    %v2249 = vunpack.c.l.b16 %v2178
    %v2250 = vunpack.c.l.b16 %v2179
    %v2251 = vunpack.c.l.b16 %v2180
    %v2252 = vunpack.c.l.b16 %v2181
    %v2253 = vunpack.c.l.b16 %v2182
    %v2254 = vunpack.c.l.b16 %v2183
    %v2255 = vunpack.c.l.b16 %v2184
    %v2256 = vunpack.c.l.b16 %v2185
    %v2257 = vunpack.c.l.b16 %v2186
    %v2258 = vunpack.c.l.b16 %v2187
    %v2259 = vunpack.c.l.b16 %v2188
    %v2260 = vunpack.c.l.b16 %v2189
    %v2261 = vunpack.c.l.b16 %v2190
    %v2262 = vpack.c.b16 %v2231, %v2230
    %v2263 = vpack.c.b16 %v2233, %v2232
    %v2264 = vpack.c.b16 %v2235, %v2234
    %v2265 = vpack.c.b16 %v2237, %v2236
    %v2266 = vpack.c.b16 %v2239, %v2238
    %v2267 = vpack.c.b16 %v2241, %v2240
    %v2268 = vpack.c.b16 %v2243, %v2242
    %v2269 = vpack.c.b16 %v2245, %v2244
    %v2270 = vpack.c.b16 %v2247, %v2246
    %v2271 = vpack.c.b16 %v2249, %v2248
    %v2272 = vpack.c.b16 %v2251, %v2250
    %v2273 = vpack.c.b16 %v2253, %v2252
    %v2274 = vpack.c.b16 %v2255, %v2254
    %v2275 = vpack.c.b16 %v2257, %v2256
    %v2276 = vpack.c.b16 %v2259, %v2258
    %v2277 = vpack.c.b16 %v2261, %v2260
    %2294 = vmatprep.subr.bf16.mxu0 0
    %2295 = vmatpush1.bf16.msra.mxu0 %v2269
    %2296 = vmatprep.subr.bf16.mxu0 0
    %2297 = vmatpush1.bf16.msra.mxu0 %v2268
    %2298 = vmatprep.subr.bf16.mxu0 0
    %2299 = vmatpush1.bf16.msra.mxu0 %v2267
    %2300 = vmatprep.subr.bf16.mxu0 0
    %2301 = vmatpush1.bf16.msra.mxu0 %v2266
    %2302 = vmatprep.subr.bf16.mxu0 0
    %2303 = vmatpush1.bf16.msra.mxu0 %v2265
    %2304 = vmatprep.subr.bf16.mxu0 0
    %2305 = vmatpush1.bf16.msra.mxu0 %v2264
    %2306 = vmatprep.subr.bf16.mxu0 0
    %2307 = vmatpush1.bf16.msra.mxu0 %v2263
    %2308 = vmatprep.subr.bf16.mxu0 0
    %2309 = vmatpush1.bf16.msra.mxu0 %v2262
    %2310 = vmatprep.subr.bf16.mxu0 0
    %2311 = vmatpush2.bf16.msra.mxu0 %v2277
    %2312 = vmatprep.subr.bf16.mxu0 0
    %2313 = vmatpush2.bf16.msra.mxu0 %v2276
    %2314 = vmatprep.subr.bf16.mxu0 0
    %2315 = vmatpush2.bf16.msra.mxu0 %v2275
    %2316 = vmatprep.subr.bf16.mxu0 0
    %2317 = vmatpush2.bf16.msra.mxu0 %v2274
    %2318 = vmatprep.subr.bf16.mxu0 0
    %2319 = vmatpush2.bf16.msra.mxu0 %v2273
    %2320 = vmatprep.subr.bf16.mxu0 0
    %2321 = vmatpush2.bf16.msra.mxu0 %v2272
    %2322 = vmatprep.subr.bf16.mxu0 0
    %2323 = vmatpush2.bf16.msra.mxu0 %v2271
    %2324 = vmatprep.subr.bf16.mxu0 0
    %2325 = vmatpush2.bf16.msra.mxu0 %v2270
    %2326 = vmatprep.mubr.bf16.mxu0 %v2158
    %2327 = vmatmul.mubr.bf16.gmra.mxu0 %v2157
    %v2328 = vpop.f32.mrf.mxu0
    %v2329 = vadd.f32 %v2196, %v2328
    %v2330 = vpop.f32.mrf.mxu0
    %v2331 = vpop.f32.mrf.mxu0
    %v2332 = vadd.f32 %v2196, %v2331
    %v2333 = vpop.f32.mrf.mxu0
    %2334 = vdwg.mxu0
    %v2335 = vmax.f32 %v2329, 0.0
    %v2336 = vmax.f32 %v2332, 0.0
    %v2337 = vpack.c.bf16 %v2336, %v2335
    %v2338 = vld [vmem:[%s7] sm:$0xf]
    %v2339 = vld [vmem:[%s7 + $0x4] sm:$0xf]
    %v2340 = vld [vmem:[%s7 + $0x8] sm:$0xf]
    %v2341 = vld [vmem:[%s7 + $0xc] sm:$0xf]
    %v2342 = vld [vmem:[%s7 + $0x10] sm:$0xf]
    %v2343 = vld [vmem:[%s7 + $0x14] sm:$0xf]
    %v2344 = vld [vmem:[%s7 + $0x18] sm:$0xf]
    %v2345 = vld [vmem:[%s7 + $0x1c] sm:$0xf]
    %v2346 = vld [vmem:[%s7 + $0x20] sm:$0xf]
    %v2347 = vld [vmem:[%s7 + $0x24] sm:$0xf]
    %v2348 = vld [vmem:[%s7 + $0x28] sm:$0xf]
    %v2349 = vld [vmem:[%s7 + $0x2c] sm:$0xf]
    %v2350 = vld [vmem:[%s7 + $0x30] sm:$0xf]
    %v2351 = vld [vmem:[%s7 + $0x34] sm:$0xf]
    %v2352 = vld [vmem:[%s7 + $0x38] sm:$0xf]
    %v2353 = vld [vmem:[%s7 + $0x3c] sm:$0xf]
    %v2354 = vld [vmem:[%s8] sm:$0x1]
    %v2356 = vlaneseq
    %v2357 = vshrl.u32 %v2356, 7
    %v2358 = vsub.s32 0, %v2357
    %v2359 = vrot.slane %v2354, %v2358
    %v2377 = vunpack.c.l.b16 %v2338
    %v2378 = vunpack.c.l.b16 %v2339
    %v2379 = vunpack.c.l.b16 %v2340
    %v2380 = vunpack.c.l.b16 %v2341
    %v2381 = vunpack.c.l.b16 %v2342
    %v2382 = vunpack.c.l.b16 %v2343
    %v2383 = vunpack.c.l.b16 %v2344
    %v2384 = vunpack.c.l.b16 %v2345
    %v2385 = vunpack.c.l.b16 %v2346
    %v2386 = vunpack.c.l.b16 %v2347
    %v2387 = vunpack.c.l.b16 %v2348
    %v2388 = vunpack.c.l.b16 %v2349
    %v2389 = vunpack.c.l.b16 %v2350
    %v2390 = vunpack.c.l.b16 %v2351
    %v2391 = vunpack.c.l.b16 %v2352
    %v2392 = vunpack.c.l.b16 %v2353
    %v2393 = vpack.c.b16 %v2378, %v2377
    %v2394 = vpack.c.b16 %v2380, %v2379
    %v2395 = vpack.c.b16 %v2382, %v2381
    %v2396 = vpack.c.b16 %v2384, %v2383
    %v2397 = vpack.c.b16 %v2386, %v2385
    %v2398 = vpack.c.b16 %v2388, %v2387
    %v2399 = vpack.c.b16 %v2390, %v2389
    %v2400 = vpack.c.b16 %v2392, %v2391
    %2409 = vmatprep.subr.bf16.mxu0 0
    %2410 = vmatpush1.bf16.msra.mxu0 %v2400
    %2411 = vmatprep.subr.bf16.mxu0 0
    %2412 = vmatpush1.bf16.msra.mxu0 %v2399
    %2413 = vmatprep.subr.bf16.mxu0 0
    %2414 = vmatpush1.bf16.msra.mxu0 %v2398
    %2415 = vmatprep.subr.bf16.mxu0 0
    %2416 = vmatpush1.bf16.msra.mxu0 %v2397
    %2417 = vmatprep.subr.bf16.mxu0 0
    %2418 = vmatpush1.bf16.msra.mxu0 %v2396
    %2419 = vmatprep.subr.bf16.mxu0 0
    %2420 = vmatpush1.bf16.msra.mxu0 %v2395
    %2421 = vmatprep.subr.bf16.mxu0 0
    %2422 = vmatpush1.bf16.msra.mxu0 %v2394
    %2423 = vmatprep.subr.bf16.mxu0 0
    %2424 = vmatpush1.bf16.msra.mxu0 %v2393
    %2425 = vmatprep.subr.bf16.mxu0 0
    %2426 = vmatpush2.bf16.msra.mxu0 0
    %2427 = vmatprep.subr.bf16.mxu0 0
    %2428 = vmatpush2.bf16.msra.mxu0 0
    %2429 = vmatprep.subr.bf16.mxu0 0
    %2430 = vmatpush2.bf16.msra.mxu0 0
    %2431 = vmatprep.subr.bf16.mxu0 0
    %2432 = vmatpush2.bf16.msra.mxu0 0
    %2433 = vmatprep.subr.bf16.mxu0 0
    %2434 = vmatpush2.bf16.msra.mxu0 0
    %2435 = vmatprep.subr.bf16.mxu0 0
    %2436 = vmatpush2.bf16.msra.mxu0 0
    %2437 = vmatprep.subr.bf16.mxu0 0
    %2438 = vmatpush2.bf16.msra.mxu0 0
    %2439 = vmatprep.subr.bf16.mxu0 0
    %2440 = vmatpush2.bf16.msra.mxu0 0
    %2441 = vmatprep.mubr.bf16.mxu0 0
    %2442 = vmatmul.mubr.bf16.gmra.mxu0 %v2337
    %v2443 = vpop.f32.mrf.mxu0
    %v2444 = vadd.f32 %v2359, %v2443
    %v2445 = vpop.f32.mrf.mxu0
    %v2446 = vpop.f32.mrf.mxu0
    %v2447 = vadd.f32 %v2359, %v2446
    %v2448 = vpop.f32.mrf.mxu0
    %2449 = vdwg.mxu0
    %v2450 = vmax.f32 %v2444, 0.0
    %v2451 = vmax.f32 %v2447, 0.0
    %v2452 = vpack.c.bf16 %v2451, %v2450
    %v2453 = vld [vmem:[%s9] sm:$0xf]
    %v2454 = vld [vmem:[%s9 + $0x4] sm:$0xf]
    %v2455 = vld [vmem:[%s9 + $0x8] sm:$0xf]
    %v2456 = vld [vmem:[%s9 + $0xc] sm:$0xf]
    %v2457 = vld [vmem:[%s9 + $0x10] sm:$0xf]
    %v2458 = vld [vmem:[%s9 + $0x14] sm:$0xf]
    %v2459 = vld [vmem:[%s9 + $0x18] sm:$0xf]
    %v2460 = vld [vmem:[%s9 + $0x1c] sm:$0xf]
    %v2461 = vld [vmem:[%s10] sm:$0x1]
    %v2463 = vlaneseq
    %v2464 = vshrl.u32 %v2463, 7
    %v2465 = vsub.s32 0, %v2464
    %v2466 = vrot.slane %v2461, %v2465
    %v2476 = vunpack.c.l.b16 %v2453
    %v2477 = vunpack.c.l.b16 %v2454
    %v2478 = vunpack.c.l.b16 %v2455
    %v2479 = vunpack.c.l.b16 %v2456
    %v2480 = vunpack.c.l.b16 %v2457
    %v2481 = vunpack.c.l.b16 %v2458
    %v2482 = vunpack.c.l.b16 %v2459
    %v2483 = vunpack.c.l.b16 %v2460
    %v2484 = vpack.c.b16 %v2477, %v2476
    %v2485 = vpack.c.b16 %v2479, %v2478
    %v2486 = vpack.c.b16 %v2481, %v2480
    %v2487 = vpack.c.b16 %v2483, %v2482
    %vm2492 = vcmask 523264
    %v2494 = vsel %vm2492, %v2452, 0
    %2496 = vmatprep.subr.bf16.mxu0 0
    %2497 = vmatpush1.bf16.msra.mxu0 0
    %2498 = vmatprep.subr.bf16.mxu0 0
    %2499 = vmatpush1.bf16.msra.mxu0 0
    %2500 = vmatprep.subr.bf16.mxu0 0
    %2501 = vmatpush1.bf16.msra.mxu0 0
    %2502 = vmatprep.subr.bf16.mxu0 0
    %2503 = vmatpush1.bf16.msra.mxu0 0
    %2504 = vmatprep.subr.bf16.mxu0 0
    %2505 = vmatpush1.bf16.msra.mxu0 %v2487
    %2506 = vmatprep.subr.bf16.mxu0 0
    %2507 = vmatpush1.bf16.msra.mxu0 %v2486
    %2508 = vmatprep.subr.bf16.mxu0 0
    %2509 = vmatpush1.bf16.msra.mxu0 %v2485
    %2510 = vmatprep.subr.bf16.mxu0 0
    %2511 = vmatpush1.bf16.msra.mxu0 %v2484
    %2512 = vmatprep.subr.bf16.mxu0 0
    %2513 = vmatpush2.bf16.msra.mxu0 0
    %2514 = vmatprep.subr.bf16.mxu0 0
    %2515 = vmatpush2.bf16.msra.mxu0 0
    %2516 = vmatprep.subr.bf16.mxu0 0
    %2517 = vmatpush2.bf16.msra.mxu0 0
    %2518 = vmatprep.subr.bf16.mxu0 0
    %2519 = vmatpush2.bf16.msra.mxu0 0
    %2520 = vmatprep.subr.bf16.mxu0 0
    %2521 = vmatpush2.bf16.msra.mxu0 0
    %2522 = vmatprep.subr.bf16.mxu0 0
    %2523 = vmatpush2.bf16.msra.mxu0 0
    %2524 = vmatprep.subr.bf16.mxu0 0
    %2525 = vmatpush2.bf16.msra.mxu0 0
    %2526 = vmatprep.subr.bf16.mxu0 0
    %2527 = vmatpush2.bf16.msra.mxu0 0
    %2528 = vmatprep.mubr.bf16.mxu0 0
    %2529 = vmatmul.mubr.bf16.gmra.mxu0 %v2494
    %v2530 = vpop.f32.mrf.mxu0
    %v2531 = vadd.f32 %v2466, %v2530
    %v2532 = vpop.f32.mrf.mxu0
    %v2533 = vpop.f32.mrf.mxu0
    %v2534 = vadd.f32 %v2466, %v2533
    %v2535 = vpop.f32.mrf.mxu0
    %2536 = vdwg.mxu0
    %v2537 = vmax.f32 %v2531, 0.0
    %v2538 = vmax.f32 %v2534, 0.0
    %v2539 = vpack.c.bf16 %v2538, %v2537
    %v2540 = vld [vmem:[%s11] sm:$0xf]
    %v2541 = vld [vmem:[%s11 + $0x4] sm:$0xf]
    %v2542 = vld [vmem:[%s11 + $0x8] sm:$0xf]
    %v2543 = vld [vmem:[%s11 + $0xc] sm:$0xf]
    %v2544 = vld [vmem:[%s12] sm:$0x1]
    %v2546 = vlaneseq
    %v2547 = vshrl.u32 %v2546, 7
    %v2548 = vsub.s32 0, %v2547
    %v2549 = vrot.slane %v2544, %v2548
    %v2555 = vunpack.c.l.b16 %v2540
    %v2556 = vunpack.c.l.b16 %v2541
    %v2557 = vunpack.c.l.b16 %v2542
    %v2558 = vunpack.c.l.b16 %v2543
    %v2559 = vpack.c.b16 %v2556, %v2555
    %v2560 = vpack.c.b16 %v2558, %v2557
    %vm2563 = vcmask 261120
    %v2565 = vsel %vm2563, %v2539, 0
    %2567 = vmatprep.subr.bf16.mxu0 0
    %2568 = vmatpush1.bf16.msra.mxu0 0
    %2569 = vmatprep.subr.bf16.mxu0 0
    %2570 = vmatpush1.bf16.msra.mxu0 0
    %2571 = vmatprep.subr.bf16.mxu0 0
    %2572 = vmatpush1.bf16.msra.mxu0 0
    %2573 = vmatprep.subr.bf16.mxu0 0
    %2574 = vmatpush1.bf16.msra.mxu0 0
    %2575 = vmatprep.subr.bf16.mxu0 0
    %2576 = vmatpush1.bf16.msra.mxu0 0
    %2577 = vmatprep.subr.bf16.mxu0 0
    %2578 = vmatpush1.bf16.msra.mxu0 0
    %2579 = vmatprep.subr.bf16.mxu0 0
    %2580 = vmatpush1.bf16.msra.mxu0 %v2560
    %2581 = vmatprep.subr.bf16.mxu0 0
    %2582 = vmatpush1.bf16.msra.mxu0 %v2559
    %2583 = vmatprep.subr.bf16.mxu0 0
    %2584 = vmatpush2.bf16.msra.mxu0 0
    %2585 = vmatprep.subr.bf16.mxu0 0
    %2586 = vmatpush2.bf16.msra.mxu0 0
    %2587 = vmatprep.subr.bf16.mxu0 0
    %2588 = vmatpush2.bf16.msra.mxu0 0
    %2589 = vmatprep.subr.bf16.mxu0 0
    %2590 = vmatpush2.bf16.msra.mxu0 0
    %2591 = vmatprep.subr.bf16.mxu0 0
    %2592 = vmatpush2.bf16.msra.mxu0 0
    %2593 = vmatprep.subr.bf16.mxu0 0
    %2594 = vmatpush2.bf16.msra.mxu0 0
    %2595 = vmatprep.subr.bf16.mxu0 0
    %2596 = vmatpush2.bf16.msra.mxu0 0
    %2597 = vmatprep.subr.bf16.mxu0 0
    %2598 = vmatpush2.bf16.msra.mxu0 0
    %2599 = vmatprep.mubr.bf16.mxu0 0
    %2600 = vmatmul.mubr.bf16.gmra.mxu0 %v2565
    %v2601 = vpop.f32.mrf.mxu0
    %v2602 = vadd.f32 %v2549, %v2601
    %v2603 = vpop.f32.mrf.mxu0
    %v2604 = vpop.f32.mrf.mxu0
    %v2605 = vadd.f32 %v2549, %v2604
    %v2606 = vpop.f32.mrf.mxu0
    %2607 = vdwg.mxu0
    %2608 = vst [vmem:[#allocation2] sm:$0xff] %v2602
    %2609 = vst [vmem:[#allocation2 + $0x8] sm:$0xff] %v2605
    // Predicated region
    $region54: #{dense_model_forward.1} parent=1 // pred_check
      _
    $region55: #{dense_model_forward.1} parent=1 // pred_check_branch
      %2611 = sbr.rel (0) target = $region57
    $region56: #{dense_model_forward.1} parent=1 // pred_region
      %s2613 = ssub.s32 256, 64
      %2614 = vsyncadd [#allocation3], %s2613
      %s2615 = sshll.u32 [#allocation2], 4
      %s2616 = int_to_ptr.vmem [resolvable:$true] %s2615
      %2621 = dma.vmem_to_hbm [thread:$0]  %s2616, 64, %s13, [#allocation3], 64, 64, 4
    $region57: #{dense_model_forward.1} parent=1 // pred_fallthru
      _
    // Predicated region
    $region58: #{dense_model_forward.1} parent=1 // pred_check
      _
    $region59: #{dense_model_forward.1} parent=1 // pred_check_branch
      %2623 = sbr.rel (0) target = $region61
    $region60: #{dense_model_forward.1} parent=1 // pred_region
      %2624 = dma.done [#allocation3], 256
    $region61: #{dense_model_forward.1} parent=1 // pred_fallthru
      _
    %2625 = vsyncpa [#allocation3], 1

</llo_original>
